<compile_context>
chip_gen: v6e
topology: v6e:2x2x1
jax: 0.10.0
libtpu: 0.0.40
codegen_flags: <defaults>
</compile_context>

<pallas_src>
import jax
import jax.numpy as jnp
from jax.experimental import pallas as pl
from jax.experimental.pallas import tpu as pltpu


NEG_SLOPE = 0.01  # PyTorch nn.LeakyReLU default negative_slope


def _pick_tile_b(batch, max_tile=8192):
    """Pick the lane (batch) tile.

    - single full-extent block for small or non-128-multiple batches
      (per-grid-step overhead >> data movement for tiny slabs);
    - otherwise a multiple of 128, capped at `max_tile`, sized so the grid has
      at least 2 steps with >=1024 lanes each (keeps both v7x TensorCores busy
      while every step still moves a large lane-dense slab).
    """
    if batch % 128 != 0:
        return batch                       # full-extent (possibly ragged) block
    half = (batch // 2) // 128 * 128
    if half >= 1024:
        return min(max_tile, half)
    return batch


def pack_params(params):
    """Pack the per-layer (W, b) lists into two zero-padded VMEM-friendly slabs.

    params: list of (W, b) with W shaped (out, in) (PyTorch layout) and b (out, 1).
    Returns (w_packed (L, R_out, R_in), b_packed (L, R_out, 1), layer_dims) where
    layer_dims is a static tuple of (fan_in, fan_out) per layer.
    """
    num_layers = len(params)
    r_out = max(w.shape[0] for w, _ in params)
    r_in = max(w.shape[1] for w, _ in params)
    w_packed = jnp.zeros((num_layers, r_out, r_in), jnp.float32)
    b_packed = jnp.zeros((num_layers, r_out, 1), jnp.float32)
    for i, (w, b) in enumerate(params):
        w_packed = w_packed.at[i, : w.shape[0], : w.shape[1]].set(w.astype(jnp.float32))
        b_packed = b_packed.at[i, : b.shape[0], :].set(b.astype(jnp.float32))
    layer_dims = tuple((w.shape[1], w.shape[0]) for w, _ in params)
    return w_packed, b_packed, layer_dims


def linear_block_fb(x_fb, w_packed, b_packed, layer_dims, *, tile_b=None, out_dtype=None):
    """Fused LinearBlock forward in feature-major layout (no wrapper HBM passes).

    x_fb:       (input_dim, batch) activations — batch on the 128-lane axis.
    w_packed:   (L, R_out, R_in) zero-padded weights (PyTorch (out, in) order).
    b_packed:   (L, R_out, 1)   zero-padded biases.
    layer_dims: static tuple of (fan_in, fan_out) per layer.
    Returns (input_dim, batch).
    """
    d_in, batch = x_fb.shape
    out_rows = layer_dims[-1][1]
    out_dtype = x_fb.dtype if out_dtype is None else out_dtype
    if tile_b is None:
        tile_b = _pick_tile_b(batch)
    n_layers = len(layer_dims)

    def kernel(x_ref, w_ref, b_ref, o_ref):
        h = x_ref[...]                      # (d_in, TB), lane-dense
        if h.dtype != jnp.float32:
            h = h.astype(jnp.float32)
        for li, (fan_in, fan_out) in enumerate(layer_dims):
            w = w_ref[li][:fan_out, :fan_in]   # static slice of VMEM-resident slab
            b = b_ref[li][:fan_out, :]         # (fan_out, 1), lane-broadcast
            h = jnp.dot(w, h, preferred_element_type=jnp.float32) + b
            if li < n_layers - 1:
                h = jnp.maximum(h, NEG_SLOPE * h)   # LeakyReLU: one mul + one max
        o_ref[...] = h.astype(o_ref.dtype)

    flops = 2 * batch * sum(fi * fo for fi, fo in layer_dims)
    param_bytes = (w_packed.size * w_packed.dtype.itemsize
                   + b_packed.size * b_packed.dtype.itemsize)
    bytes_accessed = (batch * d_in * x_fb.dtype.itemsize
                      + batch * out_rows * jnp.dtype(out_dtype).itemsize
                      + param_bytes)

    return pl.pallas_call(
        kernel,
        out_shape=jax.ShapeDtypeStruct((out_rows, batch), out_dtype),
        grid=(pl.cdiv(batch, tile_b),),
        in_specs=[
            pl.BlockSpec((d_in, tile_b), lambda i: (0, i)),
            # Full-extent blocks + constant index_maps: one DMA each, resident in
            # VMEM across every grid step.
            pl.BlockSpec(w_packed.shape, lambda i: (0, 0, 0)),
            pl.BlockSpec(b_packed.shape, lambda i: (0, 0, 0)),
        ],
        out_specs=pl.BlockSpec((out_rows, tile_b), lambda i: (0, i)),
        compiler_params=pltpu.CompilerParams(
            dimension_semantics=("parallel",)),
        cost_estimate=pl.CostEstimate(
            flops=flops, transcendentals=0, bytes_accessed=bytes_accessed),
    )(x_fb, w_packed, b_packed)


def linear_block_forward(x_bd, w_packed, b_packed, layer_dims, **kw):
    """PyTorch-layout interface: (batch, input_dim) -> (batch, input_dim).

    The two transposes below are full extra HBM passes; in the surrounding flow
    model, keep activations feature-major end-to-end and call linear_block_fb
    directly to avoid them.
    """
    # TODO(synk): absorb these boundary transposes into the producing/consuming ops
    # of the surrounding model instead of paying them around every block.
    return linear_block_fb(x_bd.T, w_packed, b_packed, layer_dims, **kw).T


def init_params(key, input_dim, hidden_dim=8, hidden_layers=3):
    """Deterministic synthetic init (PyTorch-style uniform bounds).
    Weights stored PyTorch-style as (out, in); biases as (out, 1)."""
    dims = [(input_dim, hidden_dim)]
    dims += [(hidden_dim, hidden_dim)] * hidden_layers
    dims += [(hidden_dim, input_dim)]
    params = []
    for (fan_in, fan_out) in dims:
        key, kw_, kb_ = jax.random.split(key, 3)
        bound = 1.0 / jnp.sqrt(fan_in)
        w = jax.random.uniform(kw_, (fan_out, fan_in), jnp.float32, -bound, bound)
        b = jax.random.uniform(kb_, (fan_out, 1), jnp.float32, -bound, bound)
        params.append((w, b))
    return params


def reference_forward(x_bd, params):
    h = x_bd
    for i, (w, b) in enumerate(params):
        h = h @ w.T + b.T
        if i < len(params) - 1:
            h = jnp.maximum(h, NEG_SLOPE * h)
    return h


if __name__ == "__main__":
    key = jax.random.PRNGKey(0)
    input_dim = 4
    hidden_dim = 8
    hidden_layers = 3
    batch = 2048  # feature-major slab (4, 2048) -> two 1024-lane grid steps

    k_x, k_p = jax.random.split(key)
    params = init_params(k_p, input_dim, hidden_dim=hidden_dim, hidden_layers=hidden_layers)
    w_packed, b_packed, layer_dims = pack_params(params)

    # Canonical feature-major activations (batch on lanes) — no transpose/pad needed.
    x_fb = jax.random.normal(k_x, (input_dim, batch), jnp.float32)

    out_fb = jax.block_until_ready(linear_block_fb(x_fb, w_packed, b_packed, layer_dims))
    ref_fb = reference_forward(x_fb.T, params).T
    assert out_fb.shape == (input_dim, batch)
    assert jnp.allclose(out_fb, ref_fb, atol=1e-5, rtol=1e-4), float(
        jnp.max(jnp.abs(out_fb - ref_fb)))

    # PyTorch (batch, features) interface check (boundary transposes only).
    out_bd = jax.block_until_ready(
        linear_block_forward(x_fb.T, w_packed, b_packed, layer_dims))
    assert out_bd.shape == (batch, input_dim)
    assert jnp.allclose(out_bd, ref_fb.T, atol=1e-5, rtol=1e-4), float(
        jnp.max(jnp.abs(out_bd - ref_fb.T)))

    print("KERNEL_OK")
</pallas_src>

<mosaic_0001>
module attributes {stable_mosaic.version = 11 : i64} {
  func.func @kernel(%arg0: i32, %arg1: memref<4x1024xf32, #tpu.memory_space<vmem>>, %arg2: memref<5x8x8xf32, #tpu.memory_space<vmem>>, %arg3: memref<5x8x1xf32, #tpu.memory_space<vmem>>, %arg4: memref<4x1024xf32, #tpu.memory_space<vmem>>) attributes {dimension_semantics = [#tpu.dimension_semantics<parallel>], iteration_bounds = array<i64: 2>, scalar_prefetch = 0 : i64, scratch_operands = 0 : i64, tpu.core_type = #tpu.core_type<tc>, window_params = [{transform_indices = @transform_0, window_bounds = array<i64: 4, 1024>}, {pipeline_mode = #tpu.pipeline_mode<synchronous>, transform_indices = @transform_1, window_bounds = array<i64: 5, 8, 8>}, {pipeline_mode = #tpu.pipeline_mode<synchronous>, transform_indices = @transform_2, window_bounds = array<i64: 5, 8, 1>}, {transform_indices = @transform_3, window_bounds = array<i64: 4, 1024>}]} {
    %c0 = arith.constant 0 : index
    %c0_0 = arith.constant 0 : index
    %0 = vector.load %arg1[%c0, %c0_0] : memref<4x1024xf32, #tpu.memory_space<vmem>>, vector<4x1024xf32>
    %c0_1 = arith.constant 0 : index
    %c0_2 = arith.constant 0 : index
    %c0_3 = arith.constant 0 : index
    %1 = vector.load %arg2[%c0_1, %c0_2, %c0_3] : memref<5x8x8xf32, #tpu.memory_space<vmem>>, vector<1x8x8xf32>
    %2 = vector.shape_cast %1 : vector<1x8x8xf32> to vector<8x8xf32>
    %3 = vector.extract_strided_slice %2 {offsets = [0, 0], sizes = [8, 4], strides = [1, 1]} : vector<8x8xf32> to vector<8x4xf32>
    %c0_4 = arith.constant 0 : index
    %c0_5 = arith.constant 0 : index
    %c0_6 = arith.constant 0 : index
    %4 = vector.load %arg3[%c0_4, %c0_5, %c0_6] : memref<5x8x1xf32, #tpu.memory_space<vmem>>, vector<1x8x1xf32>
    %5 = vector.shape_cast %4 : vector<1x8x1xf32> to vector<8x1xf32>
    %cst = arith.constant dense<0.000000e+00> : vector<8x1024xf32>
    %6 = tpu.matmul %3, %0, %cst {dimension_numbers = #tpu.dot_dimension_numbers<[1], [0], [0], [1], [0, 0, 1, 1], [], []>} : vector<8x4xf32>, vector<4x1024xf32>, vector<8x1024xf32> -> vector<8x1024xf32>
    %7 = vector.broadcast %5 : vector<8x1xf32> to vector<8x1024xf32>
    %8 = arith.addf %6, %7 : vector<8x1024xf32>
    %cst_7 = arith.constant 0.00999999977 : f32
    %9 = vector.broadcast %cst_7 : f32 to vector<8x1024xf32>
    %10 = arith.mulf %9, %8 : vector<8x1024xf32>
    %11 = arith.maximumf %8, %10 : vector<8x1024xf32>
    %c1 = arith.constant 1 : index
    %c0_8 = arith.constant 0 : index
    %c0_9 = arith.constant 0 : index
    %12 = vector.load %arg2[%c1, %c0_8, %c0_9] : memref<5x8x8xf32, #tpu.memory_space<vmem>>, vector<1x8x8xf32>
    %13 = vector.shape_cast %12 : vector<1x8x8xf32> to vector<8x8xf32>
    %c1_10 = arith.constant 1 : index
    %c0_11 = arith.constant 0 : index
    %c0_12 = arith.constant 0 : index
    %14 = vector.load %arg3[%c1_10, %c0_11, %c0_12] : memref<5x8x1xf32, #tpu.memory_space<vmem>>, vector<1x8x1xf32>
    %15 = vector.shape_cast %14 : vector<1x8x1xf32> to vector<8x1xf32>
    %cst_13 = arith.constant dense<0.000000e+00> : vector<8x1024xf32>
    %16 = tpu.matmul %13, %11, %cst_13 {dimension_numbers = #tpu.dot_dimension_numbers<[1], [0], [0], [1], [0, 0, 1, 1], [], []>} : vector<8x8xf32>, vector<8x1024xf32>, vector<8x1024xf32> -> vector<8x1024xf32>
    %17 = vector.broadcast %15 : vector<8x1xf32> to vector<8x1024xf32>
    %18 = arith.addf %16, %17 : vector<8x1024xf32>
    %cst_14 = arith.constant 0.00999999977 : f32
    %19 = vector.broadcast %cst_14 : f32 to vector<8x1024xf32>
    %20 = arith.mulf %19, %18 : vector<8x1024xf32>
    %21 = arith.maximumf %18, %20 : vector<8x1024xf32>
    %c2 = arith.constant 2 : index
    %c0_15 = arith.constant 0 : index
    %c0_16 = arith.constant 0 : index
    %22 = vector.load %arg2[%c2, %c0_15, %c0_16] : memref<5x8x8xf32, #tpu.memory_space<vmem>>, vector<1x8x8xf32>
    %23 = vector.shape_cast %22 : vector<1x8x8xf32> to vector<8x8xf32>
    %c2_17 = arith.constant 2 : index
    %c0_18 = arith.constant 0 : index
    %c0_19 = arith.constant 0 : index
    %24 = vector.load %arg3[%c2_17, %c0_18, %c0_19] : memref<5x8x1xf32, #tpu.memory_space<vmem>>, vector<1x8x1xf32>
    %25 = vector.shape_cast %24 : vector<1x8x1xf32> to vector<8x1xf32>
    %cst_20 = arith.constant dense<0.000000e+00> : vector<8x1024xf32>
    %26 = tpu.matmul %23, %21, %cst_20 {dimension_numbers = #tpu.dot_dimension_numbers<[1], [0], [0], [1], [0, 0, 1, 1], [], []>} : vector<8x8xf32>, vector<8x1024xf32>, vector<8x1024xf32> -> vector<8x1024xf32>
    %27 = vector.broadcast %25 : vector<8x1xf32> to vector<8x1024xf32>
    %28 = arith.addf %26, %27 : vector<8x1024xf32>
    %cst_21 = arith.constant 0.00999999977 : f32
    %29 = vector.broadcast %cst_21 : f32 to vector<8x1024xf32>
    %30 = arith.mulf %29, %28 : vector<8x1024xf32>
    %31 = arith.maximumf %28, %30 : vector<8x1024xf32>
    %c3 = arith.constant 3 : index
    %c0_22 = arith.constant 0 : index
    %c0_23 = arith.constant 0 : index
    %32 = vector.load %arg2[%c3, %c0_22, %c0_23] : memref<5x8x8xf32, #tpu.memory_space<vmem>>, vector<1x8x8xf32>
    %33 = vector.shape_cast %32 : vector<1x8x8xf32> to vector<8x8xf32>
    %c3_24 = arith.constant 3 : index
    %c0_25 = arith.constant 0 : index
    %c0_26 = arith.constant 0 : index
    %34 = vector.load %arg3[%c3_24, %c0_25, %c0_26] : memref<5x8x1xf32, #tpu.memory_space<vmem>>, vector<1x8x1xf32>
    %35 = vector.shape_cast %34 : vector<1x8x1xf32> to vector<8x1xf32>
    %cst_27 = arith.constant dense<0.000000e+00> : vector<8x1024xf32>
    %36 = tpu.matmul %33, %31, %cst_27 {dimension_numbers = #tpu.dot_dimension_numbers<[1], [0], [0], [1], [0, 0, 1, 1], [], []>} : vector<8x8xf32>, vector<8x1024xf32>, vector<8x1024xf32> -> vector<8x1024xf32>
    %37 = vector.broadcast %35 : vector<8x1xf32> to vector<8x1024xf32>
    %38 = arith.addf %36, %37 : vector<8x1024xf32>
    %cst_28 = arith.constant 0.00999999977 : f32
    %39 = vector.broadcast %cst_28 : f32 to vector<8x1024xf32>
    %40 = arith.mulf %39, %38 : vector<8x1024xf32>
    %41 = arith.maximumf %38, %40 : vector<8x1024xf32>
    %c4 = arith.constant 4 : index
    %c0_29 = arith.constant 0 : index
    %c0_30 = arith.constant 0 : index
    %42 = vector.load %arg2[%c4, %c0_29, %c0_30] : memref<5x8x8xf32, #tpu.memory_space<vmem>>, vector<1x8x8xf32>
    %43 = vector.shape_cast %42 : vector<1x8x8xf32> to vector<8x8xf32>
    %44 = vector.extract_strided_slice %43 {offsets = [0, 0], sizes = [4, 8], strides = [1, 1]} : vector<8x8xf32> to vector<4x8xf32>
    %c4_31 = arith.constant 4 : index
    %c0_32 = arith.constant 0 : index
    %c0_33 = arith.constant 0 : index
    %45 = vector.load %arg3[%c4_31, %c0_32, %c0_33] : memref<5x8x1xf32, #tpu.memory_space<vmem>>, vector<1x8x1xf32>
    %46 = vector.shape_cast %45 : vector<1x8x1xf32> to vector<8x1xf32>
    %47 = vector.extract_strided_slice %46 {offsets = [0, 0], sizes = [4, 1], strides = [1, 1]} : vector<8x1xf32> to vector<4x1xf32>
    %cst_34 = arith.constant dense<0.000000e+00> : vector<4x1024xf32>
    %48 = tpu.matmul %44, %41, %cst_34 {dimension_numbers = #tpu.dot_dimension_numbers<[1], [0], [0], [1], [0, 0, 1, 1], [], []>} : vector<4x8xf32>, vector<8x1024xf32>, vector<4x1024xf32> -> vector<4x1024xf32>
    %49 = vector.broadcast %47 : vector<4x1xf32> to vector<4x1024xf32>
    %50 = arith.addf %48, %49 : vector<4x1024xf32>
    %c0_35 = arith.constant 0 : index
    %c0_36 = arith.constant 0 : index
    %51 = vector.load %arg4[%c0_35, %c0_36] : memref<4x1024xf32, #tpu.memory_space<vmem>>, vector<4x1024xf32>
    tpu.vector_store %arg4[%c0_35, %c0_36], %50 {strides = array<i32>} : memref<4x1024xf32, #tpu.memory_space<vmem>>, vector<4x1024xf32>,
    return
  }
  func.func @transform_0(%arg0: i32) -> (i32, i32) {
    %c0_i32 = arith.constant 0 : i32
    %c0_i32_0 = arith.constant 0 : i32
    return %c0_i32, %arg0 : i32, i32
  }
  func.func @transform_1(%arg0: i32) -> (i32, i32, i32) {
    %c0_i32 = arith.constant 0 : i32
    %c0_i32_0 = arith.constant 0 : i32
    %c0_i32_1 = arith.constant 0 : i32
    %c0_i32_2 = arith.constant 0 : i32
    return %c0_i32, %c0_i32_0, %c0_i32_1 : i32, i32, i32
  }
  func.func @transform_2(%arg0: i32) -> (i32, i32, i32) {
    %c0_i32 = arith.constant 0 : i32
    %c0_i32_0 = arith.constant 0 : i32
    %c0_i32_1 = arith.constant 0 : i32
    %c0_i32_2 = arith.constant 0 : i32
    return %c0_i32, %c0_i32_0, %c0_i32_1 : i32, i32, i32
  }
  func.func @transform_3(%arg0: i32) -> (i32, i32) {
    %c0_i32 = arith.constant 0 : i32
    %c0_i32_0 = arith.constant 0 : i32
    return %c0_i32, %arg0 : i32, i32
  }
}

</mosaic_0001>

<llo_original>
// kernel: tpu_custom_call.1
$region0: #{tpu_custom_call.1}
  #allocation0 [shape = 'u32[]', space=smem, size = 0x4, offset = 0x4, fixed_abs, tag = 'smem constant byte address 0x4 - core index']
  #allocation1 [shape = 'u32[144,128]{1,0:T(1,128)}', space=vmem, size = 0x12000, scoped, tag = 'internal scratch']
  %s0 = inlined_call_operand.hbm [shape: f32[4,2048], index: 0, kind: input, shape index: {}]
  %s1 = inlined_call_operand.vmem [shape: f32[5,8,8], index: 1, kind: input, shape index: {}]
  %s2 = inlined_call_operand.vmem [shape: f32[5,8,1], index: 2, kind: input, shape index: {}]
  %s3 = inlined_call_operand.hbm [shape: f32[4,2048], index: 3, kind: output, shape index: {}]
  %s4 = sld [smem:[#allocation0]]
  $region49: #{tpu_custom_call.1} parent=0
    _
  %s6 = ssub.s32 1, %s4
  %s7 = scalar_select 0, %s6, %s4
  $region1: #{tpu_custom_call.1} parent=0
    #allocation2 [shape = 'u8[32768]{0}', space=vmem, size = 0x8000, scoped, tag = 'input window, operand 0']
    #allocation3 [shape = 's32[2]{0}', space=sflag, size = 0x8, scoped, tag = 'scoped memory for tpu_custom_call.1']
    #allocation4 [shape = 's32[2]{0}', space=sflag, size = 0x8, scoped, tag = 'scoped memory for tpu_custom_call.1']
    #allocation5 [shape = 'u8[32768]{0}', space=vmem, size = 0x8000, scoped, tag = 'output window, operand 0']
    %8 = vsyncpa [#allocation3], 0
    %s9 = scalar_lea.sflag [#allocation3], 1
    %10 = vsyncpa %s9, 0
    %11 = vsyncpa [#allocation4], 0
    %s12 = scalar_lea.sflag [#allocation4], 1
    %13 = vsyncpa %s12, 0
    loop: start=0, step=1, limit=4
    $region2: #{tpu_custom_call.1} parent=1 // loop_pre_header
      _
    $region3: #{tpu_custom_call.1} parent=1 // loop_header
      %s15 = sphi 0, %s19
      %p16 = scmp.ge.s32.totalorder %s15, 4
      %s25 = sphi 0, %s27
      %s28 = sphi 0, %s25
      %s29 = sphi 0, %s28
      %s45 = sphi 0, %s29
      %s49 = sphi 0, %s49
      %s51 = sphi 0, %s49
      %s52 = sphi 0, %s51
      %s66 = sphi 0, %s52
      %s70 = sphi 0, %s70
      %s72 = sphi 0, %s70
      %s73 = sphi 0, %s72
      %s87 = sphi 0, %s73
      %s93 = sphi 0, %s95
      %s96 = sphi 0, %s93
      %s97 = sphi 0, %s96
      %s113 = sphi 0, %s97
    $region4: #{tpu_custom_call.1} parent=1 // loop_header_branch
      %18 = sbr.rel (%p16) target = $region8
    $region5: #{tpu_custom_call.1} parent=1 // loop_body
      %s20 = ssub.s32 %s15, 1
      %s21 = ssub.s32 %s15, 2
      %s22 = sadd.s32 %s15, 1
      %s23 = ssub.s32 %s15, %s22
      %p24 = scmp.eq.s32.totalorder %s23, 0
      %s26 = sadd.s32 %s25, 1
      %s27 = scalar_select %p24, %s25, %s26
      %p30 = pneg %p24
      %p31 = scmp.eq.s32.totalorder %s15, 1
      %p32 = por %p30, %p31
      %p33 = scmp.ne.s32.totalorder %s25, %s28
      %p34 = scmp.eq.s32.totalorder %s15, 0
      %p35 = por %p33, %p34
      %p36 = scmp.ne.s32.totalorder %s25, %s28
      %p37 = scmp.eq.s32.totalorder %s20, 1
      %p38 = por %p36, %p37
      %p39 = scmp.ne.s32.totalorder %s28, %s29
      %p40 = scmp.eq.s32.totalorder %s20, 0
      %p41 = por %p39, %p40
      %p42 = scmp.ne.s32.totalorder %s28, %s29
      %p43 = scmp.eq.s32.totalorder %s21, 1
      %p44 = por %p42, %p43
      %p46 = scmp.ne.s32.totalorder %s29, %s45
      %p47 = scmp.eq.s32.totalorder %s21, 0
      %p48 = por %p46, %p47
      %s50 = sadd.s32 %s49, 1
      %p53 = scmp.eq.s32.totalorder %s15, 1
      %p54 = scmp.ne.s32.totalorder %s49, %s51
      %p55 = scmp.eq.s32.totalorder %s15, 0
      %p56 = por %p54, %p55
      %p57 = scmp.ne.s32.totalorder %s49, %s51
      %p58 = scmp.eq.s32.totalorder %s20, 1
      %p59 = por %p57, %p58
      %p60 = scmp.ne.s32.totalorder %s51, %s52
      %p61 = scmp.eq.s32.totalorder %s20, 0
      %p62 = por %p60, %p61
      %p63 = scmp.ne.s32.totalorder %s51, %s52
      %p64 = scmp.eq.s32.totalorder %s21, 1
      %p65 = por %p63, %p64
      %p67 = scmp.ne.s32.totalorder %s52, %s66
      %p68 = scmp.eq.s32.totalorder %s21, 0
      %p69 = por %p67, %p68
      %s71 = sadd.s32 %s70, 1
      %p74 = scmp.eq.s32.totalorder %s15, 1
      %p75 = scmp.ne.s32.totalorder %s70, %s72
      %p76 = scmp.eq.s32.totalorder %s15, 0
      %p77 = por %p75, %p76
      %p78 = scmp.ne.s32.totalorder %s70, %s72
      %p79 = scmp.eq.s32.totalorder %s20, 1
      %p80 = por %p78, %p79
      %p81 = scmp.ne.s32.totalorder %s72, %s73
      %p82 = scmp.eq.s32.totalorder %s20, 0
      %p83 = por %p81, %p82
      %p84 = scmp.ne.s32.totalorder %s72, %s73
      %p85 = scmp.eq.s32.totalorder %s21, 1
      %p86 = por %p84, %p85
      %p88 = scmp.ne.s32.totalorder %s73, %s87
      %p89 = scmp.eq.s32.totalorder %s21, 0
      %p90 = por %p88, %p89
      %s91 = ssub.s32 %s15, %s22
      %p92 = scmp.eq.s32.totalorder %s91, 0
      %s94 = sadd.s32 %s93, 1
      %s95 = scalar_select %p92, %s93, %s94
      %p98 = pneg %p92
      %p99 = scmp.eq.s32.totalorder %s15, 1
      %p100 = por %p98, %p99
      %p101 = scmp.ne.s32.totalorder %s93, %s96
      %p102 = scmp.eq.s32.totalorder %s15, 0
      %p103 = por %p101, %p102
      %p104 = scmp.ne.s32.totalorder %s93, %s96
      %p105 = scmp.eq.s32.totalorder %s20, 1
      %p106 = por %p104, %p105
      %p107 = scmp.ne.s32.totalorder %s96, %s97
      %p108 = scmp.eq.s32.totalorder %s20, 0
      %p109 = por %p107, %p108
      %p110 = scmp.ne.s32.totalorder %s96, %s97
      %p111 = scmp.eq.s32.totalorder %s21, 1
      %p112 = por %p110, %p111
      %p114 = scmp.ne.s32.totalorder %s97, %s113
      %p115 = scmp.eq.s32.totalorder %s21, 0
      %p116 = por %p114, %p115
      %p117 = scmp.le.s32.totalorder 1, %s15
      %p118 = scmp.lt.s32.totalorder %s15, 3
      %p119 = pnand %p117, %p118
      %p120 = pneg %p119
      // Predicated region
      $region9: #{tpu_custom_call.1} parent=5 // pred_check
        _
      $region10: #{tpu_custom_call.1} parent=5 // pred_check_branch
        %122 = sbr.rel (%p119) target = $region12
      $region11: #{tpu_custom_call.1} parent=5 // pred_region
        %s123 = ssub.s32 %s15, 1
        // Predicated region
        $region13: #{tpu_custom_call.1} parent=11 // pred_check
          %p124 = pneg %p62
        $region14: #{tpu_custom_call.1} parent=11 // pred_check_branch
          %126 = sbr.rel (%p124) target = $region16
        $region15: #{tpu_custom_call.1} parent=11 // pred_region
          _
        $region16: #{tpu_custom_call.1} parent=11 // pred_fallthru
          _
        // Predicated region
        $region17: #{tpu_custom_call.1} parent=11 // pred_check
          %p127 = pneg %p83
        $region18: #{tpu_custom_call.1} parent=11 // pred_check_branch
          %129 = sbr.rel (%p127) target = $region20
        $region19: #{tpu_custom_call.1} parent=11 // pred_region
          _
        $region20: #{tpu_custom_call.1} parent=11 // pred_fallthru
          _
      $region12: #{tpu_custom_call.1} parent=5 // pred_fallthru
        _
      %p130 = scmp.lt.s32.totalorder %s15, 2
      // Predicated region
      $region21: #{tpu_custom_call.1} parent=5 // pred_check
        %p131 = pneg %p130
      $region22: #{tpu_custom_call.1} parent=5 // pred_check_branch
        %133 = sbr.rel (%p131) target = $region24
      $region23: #{tpu_custom_call.1} parent=5 // pred_region
        // Predicated region
        $region25: #{tpu_custom_call.1} parent=23 // pred_check
          %p134 = pneg %p35
        $region26: #{tpu_custom_call.1} parent=23 // pred_check_branch
          %136 = sbr.rel (%p134) target = $region28
        $region27: #{tpu_custom_call.1} parent=23 // pred_region
          %s137 = sand.u32 %s25, 1
          %s138 = scalar_lea.sflag [#allocation3], %s137
          %s139 = sand.u32 %s25, 1
          %s140 = smul.addr %s139, 32
          %s141 = scalar_lea.vmem [#allocation2], %s140
          %s142 = smul.u32 8, %s15
          %s144 = ssub.s32 512, 512
          %145 = vsyncadd %s138, %s144
          %s146 = smul.addr %s142, 64
          %s147 = scalar_lea.hbm %s0, %s146
          %s149 = sshll.u32 %s141, 4
          %s150 = int_to_ptr.vmem [resolvable:$true] %s149
          %152 = dma.hbm_to_vmem [thread:$0]  %s147, 512, %s150, %s138
        $region28: #{tpu_custom_call.1} parent=23 // pred_fallthru
          _
      $region24: #{tpu_custom_call.1} parent=5 // pred_fallthru
        _
      %p153 = scmp.le.s32.totalorder 1, %s15
      %p154 = scmp.lt.s32.totalorder %s15, 3
      %p155 = pnand %p153, %p154
      %p156 = pneg %p155
      // Predicated region
      $region29: #{tpu_custom_call.1} parent=5 // pred_check
        _
      $region30: #{tpu_custom_call.1} parent=5 // pred_check_branch
        %158 = sbr.rel (%p155) target = $region32
      $region31: #{tpu_custom_call.1} parent=5 // pred_region
        %s159 = ssub.s32 %s15, 1
        %s160 = sand.u32 %s28, 1
        %s161 = scalar_lea.sflag [#allocation3], %s160
        %s162 = sand.u32 %s28, 1
        %s163 = smul.addr %s162, 32
        %s164 = scalar_lea.vmem [#allocation2], %s163
        // Predicated region
        $region33: #{tpu_custom_call.1} parent=31 // pred_check
          %p165 = pneg %p41
        $region34: #{tpu_custom_call.1} parent=31 // pred_check_branch
          %167 = sbr.rel (%p165) target = $region36
        $region35: #{tpu_custom_call.1} parent=31 // pred_region
          %168 = dma.done %s161, 512
        $region36: #{tpu_custom_call.1} parent=31 // pred_fallthru
          _
        %s169 = sand.u32 %s28, 1
        %s170 = scalar_lea.sflag [#allocation3], %s169
        %s171 = sand.u32 %s28, 1
        %s172 = smul.addr %s171, 32
        %s173 = scalar_lea.vmem [#allocation2], %s172
        %p174 = pneg %p41
        %p175 = pneg %p38
        %p176 = pneg %p62
        %p177 = pneg %p59
        %p178 = pneg %p83
        %p179 = pneg %p80
        %p180 = pneg %p109
        %p181 = pneg %p106
        %s182 = sand.u32 %s96, 1
        %s183 = scalar_lea.sflag [#allocation4], %s182
        %s184 = sand.u32 %s96, 1
        %s185 = smul.addr %s184, 32
        %s186 = scalar_lea.vmem [#allocation5], %s185
        %s187 = smul.u32 8, %s20
        %s188 = smul.u32 8, %s20
        %v189 = vld [vmem:[%s164] sm:$0xff]
        %v190 = vld [vmem:[%s164 + $0x8] sm:$0xff]
        %v191 = vld [vmem:[%s164 + $0x10] sm:$0xff]
        %v192 = vld [vmem:[%s164 + $0x18] sm:$0xff]
        %v193 = vld [vmem:[%s1] sm:$0xff]
        %v194 = vld [vmem:[%s2] sm:$0xff]
        %196 = vset.pattern.permute.xlu0 0
        %197 = vperm.xlu0 %196, %v194
        %v198 = vpop.permute.xlu0 %197
        %v204 = vcombine.high %v189, %v189
        %v205 = vcombine.high %v190, %v190
        %v206 = vcombine.high %v191, %v191
        %v207 = vcombine.high %v192, %v192
        %vm208 = vcmask 31744
        %v210 = vsel %vm208, %v193, 0
        %vm212 = vcmask 1043456
        %v213 = vsel %vm212, %v189, 0
        %v215 = vsel %vm212, %v204, 0
        %v217 = vsel %vm212, %v190, 0
        %v219 = vsel %vm212, %v205, 0
        %v221 = vsel %vm212, %v191, 0
        %v223 = vsel %vm212, %v206, 0
        %v225 = vsel %vm212, %v192, 0
        %v227 = vsel %vm212, %v207, 0
        %229 = vmatprep.subr.mxu0 0.0
        %230 = vmatpush1.msra.mxu0 0.0
        %231 = vmatprep.subr.mxu0 0.0
        %232 = vmatpush1.msra.mxu0 0.0
        %233 = vmatprep.subr.mxu0 0.0
        %234 = vmatpush1.msra.mxu0 0.0
        %235 = vmatprep.subr.mxu0 0.0
        %236 = vmatpush1.msra.mxu0 0.0
        %237 = vmatprep.subr.mxu0 0.0
        %238 = vmatpush1.msra.mxu0 0.0
        %239 = vmatprep.subr.mxu0 0.0
        %240 = vmatpush1.msra.mxu0 0.0
        %241 = vmatprep.subr.mxu0 0.0
        %242 = vmatpush1.msra.mxu0 0.0
        %243 = vmatprep.subr.mxu0 0.0
        %244 = vmatpush1.msra.mxu0 0.0
        %245 = vmatprep.subr.mxu0 0.0
        %246 = vmatpush1.msra.mxu0 0.0
        %247 = vmatprep.subr.mxu0 0.0
        %248 = vmatpush1.msra.mxu0 0.0
        %249 = vmatprep.subr.mxu0 0.0
        %250 = vmatpush1.msra.mxu0 0.0
        %251 = vmatprep.subr.mxu0 0.0
        %252 = vmatpush1.msra.mxu0 0.0
        %253 = vmatprep.subr.mxu0 0.0
        %254 = vmatpush1.msra.mxu0 0.0
        %255 = vmatprep.subr.mxu0 0.0
        %256 = vmatpush1.msra.mxu0 0.0
        %257 = vmatprep.subr.mxu0 0.0
        %258 = vmatpush1.msra.mxu0 0.0
        %259 = vmatprep.subr.mxu0 %v215
        %260 = vmatpush1.msra.mxu0 %v213
        %261 = vmatprep.subr.mxu0 0.0
        %262 = vmatpush2.msra.mxu0 0.0
        %263 = vmatprep.subr.mxu0 0.0
        %264 = vmatpush2.msra.mxu0 0.0
        %265 = vmatprep.subr.mxu0 0.0
        %266 = vmatpush2.msra.mxu0 0.0
        %267 = vmatprep.subr.mxu0 0.0
        %268 = vmatpush2.msra.mxu0 0.0
        %269 = vmatprep.subr.mxu0 0.0
        %270 = vmatpush2.msra.mxu0 0.0
        %271 = vmatprep.subr.mxu0 0.0
        %272 = vmatpush2.msra.mxu0 0.0
        %273 = vmatprep.subr.mxu0 0.0
        %274 = vmatpush2.msra.mxu0 0.0
        %275 = vmatprep.subr.mxu0 0.0
        %276 = vmatpush2.msra.mxu0 0.0
        %277 = vmatprep.subr.mxu0 0.0
        %278 = vmatpush2.msra.mxu0 0.0
        %279 = vmatprep.subr.mxu0 0.0
        %280 = vmatpush2.msra.mxu0 0.0
        %281 = vmatprep.subr.mxu0 0.0
        %282 = vmatpush2.msra.mxu0 0.0
        %283 = vmatprep.subr.mxu0 0.0
        %284 = vmatpush2.msra.mxu0 0.0
        %285 = vmatprep.subr.mxu0 0.0
        %286 = vmatpush2.msra.mxu0 0.0
        %287 = vmatprep.subr.mxu0 0.0
        %288 = vmatpush2.msra.mxu0 0.0
        %289 = vmatprep.subr.mxu0 0.0
        %290 = vmatpush2.msra.mxu0 0.0
        %291 = vmatprep.subr.mxu0 0.0
        %292 = vmatpush2.msra.mxu0 0.0
        %293 = vmatprep.mubr.f32.mxu0 0.0
        %294 = vmatmul.mubr.f32.gmra.mxu0 %v210
        %v295 = vpop.f32.mrf.mxu0
        %v296 = vadd.f32 %v198, %v295
        %v297 = vpop.f32.mrf.mxu0
        %v298 = vadd.f32 %v198, %v297
        %299 = vdwg.mxu0
        %300 = vmatprep.subr.mxu0 0.0
        %301 = vmatpush1.msra.mxu0 0.0
        %302 = vmatprep.subr.mxu0 0.0
        %303 = vmatpush1.msra.mxu0 0.0
        %304 = vmatprep.subr.mxu0 0.0
        %305 = vmatpush1.msra.mxu0 0.0
        %306 = vmatprep.subr.mxu0 0.0
        %307 = vmatpush1.msra.mxu0 0.0
        %308 = vmatprep.subr.mxu0 0.0
        %309 = vmatpush1.msra.mxu0 0.0
        %310 = vmatprep.subr.mxu0 0.0
        %311 = vmatpush1.msra.mxu0 0.0
        %312 = vmatprep.subr.mxu0 0.0
        %313 = vmatpush1.msra.mxu0 0.0
        %314 = vmatprep.subr.mxu0 0.0
        %315 = vmatpush1.msra.mxu0 0.0
        %316 = vmatprep.subr.mxu0 0.0
        %317 = vmatpush1.msra.mxu0 0.0
        %318 = vmatprep.subr.mxu0 0.0
        %319 = vmatpush1.msra.mxu0 0.0
        %320 = vmatprep.subr.mxu0 0.0
        %321 = vmatpush1.msra.mxu0 0.0
        %322 = vmatprep.subr.mxu0 0.0
        %323 = vmatpush1.msra.mxu0 0.0
        %324 = vmatprep.subr.mxu0 0.0
        %325 = vmatpush1.msra.mxu0 0.0
        %326 = vmatprep.subr.mxu0 0.0
        %327 = vmatpush1.msra.mxu0 0.0
        %328 = vmatprep.subr.mxu0 0.0
        %329 = vmatpush1.msra.mxu0 0.0
        %330 = vmatprep.subr.mxu0 %v219
        %331 = vmatpush1.msra.mxu0 %v217
        %332 = vmatprep.subr.mxu0 0.0
        %333 = vmatpush2.msra.mxu0 0.0
        %334 = vmatprep.subr.mxu0 0.0
        %335 = vmatpush2.msra.mxu0 0.0
        %336 = vmatprep.subr.mxu0 0.0
        %337 = vmatpush2.msra.mxu0 0.0
        %338 = vmatprep.subr.mxu0 0.0
        %339 = vmatpush2.msra.mxu0 0.0
        %340 = vmatprep.subr.mxu0 0.0
        %341 = vmatpush2.msra.mxu0 0.0
        %342 = vmatprep.subr.mxu0 0.0
        %343 = vmatpush2.msra.mxu0 0.0
        %344 = vmatprep.subr.mxu0 0.0
        %345 = vmatpush2.msra.mxu0 0.0
        %346 = vmatprep.subr.mxu0 0.0
        %347 = vmatpush2.msra.mxu0 0.0
        %348 = vmatprep.subr.mxu0 0.0
        %349 = vmatpush2.msra.mxu0 0.0
        %350 = vmatprep.subr.mxu0 0.0
        %351 = vmatpush2.msra.mxu0 0.0
        %352 = vmatprep.subr.mxu0 0.0
        %353 = vmatpush2.msra.mxu0 0.0
        %354 = vmatprep.subr.mxu0 0.0
        %355 = vmatpush2.msra.mxu0 0.0
        %356 = vmatprep.subr.mxu0 0.0
        %357 = vmatpush2.msra.mxu0 0.0
        %358 = vmatprep.subr.mxu0 0.0
        %359 = vmatpush2.msra.mxu0 0.0
        %360 = vmatprep.subr.mxu0 0.0
        %361 = vmatpush2.msra.mxu0 0.0
        %362 = vmatprep.subr.mxu0 0.0
        %363 = vmatpush2.msra.mxu0 0.0
        %364 = vmatprep.mubr.f32.mxu0 0.0
        %365 = vmatmul.mubr.f32.gmra.mxu0 %v210
        %v366 = vpop.f32.mrf.mxu0
        %v367 = vadd.f32 %v198, %v366
        %v368 = vpop.f32.mrf.mxu0
        %v369 = vadd.f32 %v198, %v368
        %370 = vdwg.mxu0
        %371 = vmatprep.subr.mxu0 0.0
        %372 = vmatpush1.msra.mxu0 0.0
        %373 = vmatprep.subr.mxu0 0.0
        %374 = vmatpush1.msra.mxu0 0.0
        %375 = vmatprep.subr.mxu0 0.0
        %376 = vmatpush1.msra.mxu0 0.0
        %377 = vmatprep.subr.mxu0 0.0
        %378 = vmatpush1.msra.mxu0 0.0
        %379 = vmatprep.subr.mxu0 0.0
        %380 = vmatpush1.msra.mxu0 0.0
        %381 = vmatprep.subr.mxu0 0.0
        %382 = vmatpush1.msra.mxu0 0.0
        %383 = vmatprep.subr.mxu0 0.0
        %384 = vmatpush1.msra.mxu0 0.0
        %385 = vmatprep.subr.mxu0 0.0
        %386 = vmatpush1.msra.mxu0 0.0
        %387 = vmatprep.subr.mxu0 0.0
        %388 = vmatpush1.msra.mxu0 0.0
        %389 = vmatprep.subr.mxu0 0.0
        %390 = vmatpush1.msra.mxu0 0.0
        %391 = vmatprep.subr.mxu0 0.0
        %392 = vmatpush1.msra.mxu0 0.0
        %393 = vmatprep.subr.mxu0 0.0
        %394 = vmatpush1.msra.mxu0 0.0
        %395 = vmatprep.subr.mxu0 0.0
        %396 = vmatpush1.msra.mxu0 0.0
        %397 = vmatprep.subr.mxu0 0.0
        %398 = vmatpush1.msra.mxu0 0.0
        %399 = vmatprep.subr.mxu0 0.0
        %400 = vmatpush1.msra.mxu0 0.0
        %401 = vmatprep.subr.mxu0 %v223
        %402 = vmatpush1.msra.mxu0 %v221
        %403 = vmatprep.subr.mxu0 0.0
        %404 = vmatpush2.msra.mxu0 0.0
        %405 = vmatprep.subr.mxu0 0.0
        %406 = vmatpush2.msra.mxu0 0.0
        %407 = vmatprep.subr.mxu0 0.0
        %408 = vmatpush2.msra.mxu0 0.0
        %409 = vmatprep.subr.mxu0 0.0
        %410 = vmatpush2.msra.mxu0 0.0
        %411 = vmatprep.subr.mxu0 0.0
        %412 = vmatpush2.msra.mxu0 0.0
        %413 = vmatprep.subr.mxu0 0.0
        %414 = vmatpush2.msra.mxu0 0.0
        %415 = vmatprep.subr.mxu0 0.0
        %416 = vmatpush2.msra.mxu0 0.0
        %417 = vmatprep.subr.mxu0 0.0
        %418 = vmatpush2.msra.mxu0 0.0
        %419 = vmatprep.subr.mxu0 0.0
        %420 = vmatpush2.msra.mxu0 0.0
        %421 = vmatprep.subr.mxu0 0.0
        %422 = vmatpush2.msra.mxu0 0.0
        %423 = vmatprep.subr.mxu0 0.0
        %424 = vmatpush2.msra.mxu0 0.0
        %425 = vmatprep.subr.mxu0 0.0
        %426 = vmatpush2.msra.mxu0 0.0
        %427 = vmatprep.subr.mxu0 0.0
        %428 = vmatpush2.msra.mxu0 0.0
        %429 = vmatprep.subr.mxu0 0.0
        %430 = vmatpush2.msra.mxu0 0.0
        %431 = vmatprep.subr.mxu0 0.0
        %432 = vmatpush2.msra.mxu0 0.0
        %433 = vmatprep.subr.mxu0 0.0
        %434 = vmatpush2.msra.mxu0 0.0
        %435 = vmatprep.mubr.f32.mxu0 0.0
        %436 = vmatmul.mubr.f32.gmra.mxu0 %v210
        %v437 = vpop.f32.mrf.mxu0
        %v438 = vadd.f32 %v198, %v437
        %v439 = vpop.f32.mrf.mxu0
        %v440 = vadd.f32 %v198, %v439
        %441 = vdwg.mxu0
        %442 = vmatprep.subr.mxu0 0.0
        %443 = vmatpush1.msra.mxu0 0.0
        %444 = vmatprep.subr.mxu0 0.0
        %445 = vmatpush1.msra.mxu0 0.0
        %446 = vmatprep.subr.mxu0 0.0
        %447 = vmatpush1.msra.mxu0 0.0
        %448 = vmatprep.subr.mxu0 0.0
        %449 = vmatpush1.msra.mxu0 0.0
        %450 = vmatprep.subr.mxu0 0.0
        %451 = vmatpush1.msra.mxu0 0.0
        %452 = vmatprep.subr.mxu0 0.0
        %453 = vmatpush1.msra.mxu0 0.0
        %454 = vmatprep.subr.mxu0 0.0
        %455 = vmatpush1.msra.mxu0 0.0
        %456 = vmatprep.subr.mxu0 0.0
        %457 = vmatpush1.msra.mxu0 0.0
        %458 = vmatprep.subr.mxu0 0.0
        %459 = vmatpush1.msra.mxu0 0.0
        %460 = vmatprep.subr.mxu0 0.0
        %461 = vmatpush1.msra.mxu0 0.0
        %462 = vmatprep.subr.mxu0 0.0
        %463 = vmatpush1.msra.mxu0 0.0
        %464 = vmatprep.subr.mxu0 0.0
        %465 = vmatpush1.msra.mxu0 0.0
        %466 = vmatprep.subr.mxu0 0.0
        %467 = vmatpush1.msra.mxu0 0.0
        %468 = vmatprep.subr.mxu0 0.0
        %469 = vmatpush1.msra.mxu0 0.0
        %470 = vmatprep.subr.mxu0 0.0
        %471 = vmatpush1.msra.mxu0 0.0
        %472 = vmatprep.subr.mxu0 %v227
        %473 = vmatpush1.msra.mxu0 %v225
        %474 = vmatprep.subr.mxu0 0.0
        %475 = vmatpush2.msra.mxu0 0.0
        %476 = vmatprep.subr.mxu0 0.0
        %477 = vmatpush2.msra.mxu0 0.0
        %478 = vmatprep.subr.mxu0 0.0
        %479 = vmatpush2.msra.mxu0 0.0
        %480 = vmatprep.subr.mxu0 0.0
        %481 = vmatpush2.msra.mxu0 0.0
        %482 = vmatprep.subr.mxu0 0.0
        %483 = vmatpush2.msra.mxu0 0.0
        %484 = vmatprep.subr.mxu0 0.0
        %485 = vmatpush2.msra.mxu0 0.0
        %486 = vmatprep.subr.mxu0 0.0
        %487 = vmatpush2.msra.mxu0 0.0
        %488 = vmatprep.subr.mxu0 0.0
        %489 = vmatpush2.msra.mxu0 0.0
        %490 = vmatprep.subr.mxu0 0.0
        %491 = vmatpush2.msra.mxu0 0.0
        %492 = vmatprep.subr.mxu0 0.0
        %493 = vmatpush2.msra.mxu0 0.0
        %494 = vmatprep.subr.mxu0 0.0
        %495 = vmatpush2.msra.mxu0 0.0
        %496 = vmatprep.subr.mxu0 0.0
        %497 = vmatpush2.msra.mxu0 0.0
        %498 = vmatprep.subr.mxu0 0.0
        %499 = vmatpush2.msra.mxu0 0.0
        %500 = vmatprep.subr.mxu0 0.0
        %501 = vmatpush2.msra.mxu0 0.0
        %502 = vmatprep.subr.mxu0 0.0
        %503 = vmatpush2.msra.mxu0 0.0
        %504 = vmatprep.subr.mxu0 0.0
        %505 = vmatpush2.msra.mxu0 0.0
        %506 = vmatprep.mubr.f32.mxu0 0.0
        %507 = vmatmul.mubr.f32.gmra.mxu0 %v210
        %v508 = vpop.f32.mrf.mxu0
        %v509 = vadd.f32 %v198, %v508
        %v510 = vpop.f32.mrf.mxu0
        %v511 = vadd.f32 %v198, %v510
        %512 = vdwg.mxu0
        %v513 = vmul.f32 %v296, 0.01
        %v514 = vmul.f32 %v298, 0.01
        %v515 = vmul.f32 %v367, 0.01
        %v516 = vmul.f32 %v369, 0.01
        %v517 = vmul.f32 %v438, 0.01
        %v518 = vmul.f32 %v440, 0.01
        %v519 = vmul.f32 %v509, 0.01
        %v520 = vmul.f32 %v511, 0.01
        %v521 = vmax.f32 %v296, %v513
        %v522 = vmax.f32 %v298, %v514
        %v523 = vmax.f32 %v367, %v515
        %v524 = vmax.f32 %v369, %v516
        %v525 = vmax.f32 %v438, %v517
        %v526 = vmax.f32 %v440, %v518
        %v527 = vmax.f32 %v509, %v519
        %v528 = vmax.f32 %v511, %v520
        %s529 = scalar_lea.vmem %s1, 8
        %v530 = vld [vmem:[%s529] sm:$0xff]
        %s531 = scalar_lea.vmem %s2, 8
        %v532 = vld [vmem:[%s531] sm:$0xff]
        %534 = vset.pattern.permute.xlu0 0
        %535 = vperm.xlu0 %534, %v532
        %v536 = vpop.permute.xlu0 %535
        %vm538 = vcmask 64512
        %v540 = vsel %vm538, %v530, 0
        %542 = vmatprep.subr.mxu0 0.0
        %543 = vmatpush1.msra.mxu0 0.0
        %544 = vmatprep.subr.mxu0 0.0
        %545 = vmatpush1.msra.mxu0 0.0
        %546 = vmatprep.subr.mxu0 0.0
        %547 = vmatpush1.msra.mxu0 0.0
        %548 = vmatprep.subr.mxu0 0.0
        %549 = vmatpush1.msra.mxu0 0.0
        %550 = vmatprep.subr.mxu0 0.0
        %551 = vmatpush1.msra.mxu0 0.0
        %552 = vmatprep.subr.mxu0 0.0
        %553 = vmatpush1.msra.mxu0 0.0
        %554 = vmatprep.subr.mxu0 0.0
        %555 = vmatpush1.msra.mxu0 0.0
        %556 = vmatprep.subr.mxu0 0.0
        %557 = vmatpush1.msra.mxu0 0.0
        %558 = vmatprep.subr.mxu0 0.0
        %559 = vmatpush1.msra.mxu0 0.0
        %560 = vmatprep.subr.mxu0 0.0
        %561 = vmatpush1.msra.mxu0 0.0
        %562 = vmatprep.subr.mxu0 0.0
        %563 = vmatpush1.msra.mxu0 0.0
        %564 = vmatprep.subr.mxu0 0.0
        %565 = vmatpush1.msra.mxu0 0.0
        %566 = vmatprep.subr.mxu0 0.0
        %567 = vmatpush1.msra.mxu0 0.0
        %568 = vmatprep.subr.mxu0 0.0
        %569 = vmatpush1.msra.mxu0 0.0
        %570 = vmatprep.subr.mxu0 0.0
        %571 = vmatpush1.msra.mxu0 0.0
        %572 = vmatprep.subr.mxu0 %v522
        %573 = vmatpush1.msra.mxu0 %v521
        %574 = vmatprep.subr.mxu0 0.0
        %575 = vmatpush2.msra.mxu0 0.0
        %576 = vmatprep.subr.mxu0 0.0
        %577 = vmatpush2.msra.mxu0 0.0
        %578 = vmatprep.subr.mxu0 0.0
        %579 = vmatpush2.msra.mxu0 0.0
        %580 = vmatprep.subr.mxu0 0.0
        %581 = vmatpush2.msra.mxu0 0.0
        %582 = vmatprep.subr.mxu0 0.0
        %583 = vmatpush2.msra.mxu0 0.0
        %584 = vmatprep.subr.mxu0 0.0
        %585 = vmatpush2.msra.mxu0 0.0
        %586 = vmatprep.subr.mxu0 0.0
        %587 = vmatpush2.msra.mxu0 0.0
        %588 = vmatprep.subr.mxu0 0.0
        %589 = vmatpush2.msra.mxu0 0.0
        %590 = vmatprep.subr.mxu0 0.0
        %591 = vmatpush2.msra.mxu0 0.0
        %592 = vmatprep.subr.mxu0 0.0
        %593 = vmatpush2.msra.mxu0 0.0
        %594 = vmatprep.subr.mxu0 0.0
        %595 = vmatpush2.msra.mxu0 0.0
        %596 = vmatprep.subr.mxu0 0.0
        %597 = vmatpush2.msra.mxu0 0.0
        %598 = vmatprep.subr.mxu0 0.0
        %599 = vmatpush2.msra.mxu0 0.0
        %600 = vmatprep.subr.mxu0 0.0
        %601 = vmatpush2.msra.mxu0 0.0
        %602 = vmatprep.subr.mxu0 0.0
        %603 = vmatpush2.msra.mxu0 0.0
        %604 = vmatprep.subr.mxu0 0.0
        %605 = vmatpush2.msra.mxu0 0.0
        %606 = vmatprep.mubr.f32.mxu0 0.0
        %607 = vmatmul.mubr.f32.gmra.mxu0 %v540
        %v608 = vpop.f32.mrf.mxu0
        %v609 = vadd.f32 %v536, %v608
        %v610 = vpop.f32.mrf.mxu0
        %v611 = vadd.f32 %v536, %v610
        %612 = vdwg.mxu0
        %613 = vmatprep.subr.mxu0 0.0
        %614 = vmatpush1.msra.mxu0 0.0
        %615 = vmatprep.subr.mxu0 0.0
        %616 = vmatpush1.msra.mxu0 0.0
        %617 = vmatprep.subr.mxu0 0.0
        %618 = vmatpush1.msra.mxu0 0.0
        %619 = vmatprep.subr.mxu0 0.0
        %620 = vmatpush1.msra.mxu0 0.0
        %621 = vmatprep.subr.mxu0 0.0
        %622 = vmatpush1.msra.mxu0 0.0
        %623 = vmatprep.subr.mxu0 0.0
        %624 = vmatpush1.msra.mxu0 0.0
        %625 = vmatprep.subr.mxu0 0.0
        %626 = vmatpush1.msra.mxu0 0.0
        %627 = vmatprep.subr.mxu0 0.0
        %628 = vmatpush1.msra.mxu0 0.0
        %629 = vmatprep.subr.mxu0 0.0
        %630 = vmatpush1.msra.mxu0 0.0
        %631 = vmatprep.subr.mxu0 0.0
        %632 = vmatpush1.msra.mxu0 0.0
        %633 = vmatprep.subr.mxu0 0.0
        %634 = vmatpush1.msra.mxu0 0.0
        %635 = vmatprep.subr.mxu0 0.0
        %636 = vmatpush1.msra.mxu0 0.0
        %637 = vmatprep.subr.mxu0 0.0
        %638 = vmatpush1.msra.mxu0 0.0
        %639 = vmatprep.subr.mxu0 0.0
        %640 = vmatpush1.msra.mxu0 0.0
        %641 = vmatprep.subr.mxu0 0.0
        %642 = vmatpush1.msra.mxu0 0.0
        %643 = vmatprep.subr.mxu0 %v524
        %644 = vmatpush1.msra.mxu0 %v523
        %645 = vmatprep.subr.mxu0 0.0
        %646 = vmatpush2.msra.mxu0 0.0
        %647 = vmatprep.subr.mxu0 0.0
        %648 = vmatpush2.msra.mxu0 0.0
        %649 = vmatprep.subr.mxu0 0.0
        %650 = vmatpush2.msra.mxu0 0.0
        %651 = vmatprep.subr.mxu0 0.0
        %652 = vmatpush2.msra.mxu0 0.0
        %653 = vmatprep.subr.mxu0 0.0
        %654 = vmatpush2.msra.mxu0 0.0
        %655 = vmatprep.subr.mxu0 0.0
        %656 = vmatpush2.msra.mxu0 0.0
        %657 = vmatprep.subr.mxu0 0.0
        %658 = vmatpush2.msra.mxu0 0.0
        %659 = vmatprep.subr.mxu0 0.0
        %660 = vmatpush2.msra.mxu0 0.0
        %661 = vmatprep.subr.mxu0 0.0
        %662 = vmatpush2.msra.mxu0 0.0
        %663 = vmatprep.subr.mxu0 0.0
        %664 = vmatpush2.msra.mxu0 0.0
        %665 = vmatprep.subr.mxu0 0.0
        %666 = vmatpush2.msra.mxu0 0.0
        %667 = vmatprep.subr.mxu0 0.0
        %668 = vmatpush2.msra.mxu0 0.0
        %669 = vmatprep.subr.mxu0 0.0
        %670 = vmatpush2.msra.mxu0 0.0
        %671 = vmatprep.subr.mxu0 0.0
        %672 = vmatpush2.msra.mxu0 0.0
        %673 = vmatprep.subr.mxu0 0.0
        %674 = vmatpush2.msra.mxu0 0.0
        %675 = vmatprep.subr.mxu0 0.0
        %676 = vmatpush2.msra.mxu0 0.0
        %677 = vmatprep.mubr.f32.mxu0 0.0
        %678 = vmatmul.mubr.f32.gmra.mxu0 %v540
        %v679 = vpop.f32.mrf.mxu0
        %v680 = vadd.f32 %v536, %v679
        %v681 = vpop.f32.mrf.mxu0
        %v682 = vadd.f32 %v536, %v681
        %683 = vdwg.mxu0
        %684 = vmatprep.subr.mxu0 0.0
        %685 = vmatpush1.msra.mxu0 0.0
        %686 = vmatprep.subr.mxu0 0.0
        %687 = vmatpush1.msra.mxu0 0.0
        %688 = vmatprep.subr.mxu0 0.0
        %689 = vmatpush1.msra.mxu0 0.0
        %690 = vmatprep.subr.mxu0 0.0
        %691 = vmatpush1.msra.mxu0 0.0
        %692 = vmatprep.subr.mxu0 0.0
        %693 = vmatpush1.msra.mxu0 0.0
        %694 = vmatprep.subr.mxu0 0.0
        %695 = vmatpush1.msra.mxu0 0.0
        %696 = vmatprep.subr.mxu0 0.0
        %697 = vmatpush1.msra.mxu0 0.0
        %698 = vmatprep.subr.mxu0 0.0
        %699 = vmatpush1.msra.mxu0 0.0
        %700 = vmatprep.subr.mxu0 0.0
        %701 = vmatpush1.msra.mxu0 0.0
        %702 = vmatprep.subr.mxu0 0.0
        %703 = vmatpush1.msra.mxu0 0.0
        %704 = vmatprep.subr.mxu0 0.0
        %705 = vmatpush1.msra.mxu0 0.0
        %706 = vmatprep.subr.mxu0 0.0
        %707 = vmatpush1.msra.mxu0 0.0
        %708 = vmatprep.subr.mxu0 0.0
        %709 = vmatpush1.msra.mxu0 0.0
        %710 = vmatprep.subr.mxu0 0.0
        %711 = vmatpush1.msra.mxu0 0.0
        %712 = vmatprep.subr.mxu0 0.0
        %713 = vmatpush1.msra.mxu0 0.0
        %714 = vmatprep.subr.mxu0 %v526
        %715 = vmatpush1.msra.mxu0 %v525
        %716 = vmatprep.subr.mxu0 0.0
        %717 = vmatpush2.msra.mxu0 0.0
        %718 = vmatprep.subr.mxu0 0.0
        %719 = vmatpush2.msra.mxu0 0.0
        %720 = vmatprep.subr.mxu0 0.0
        %721 = vmatpush2.msra.mxu0 0.0
        %722 = vmatprep.subr.mxu0 0.0
        %723 = vmatpush2.msra.mxu0 0.0
        %724 = vmatprep.subr.mxu0 0.0
        %725 = vmatpush2.msra.mxu0 0.0
        %726 = vmatprep.subr.mxu0 0.0
        %727 = vmatpush2.msra.mxu0 0.0
        %728 = vmatprep.subr.mxu0 0.0
        %729 = vmatpush2.msra.mxu0 0.0
        %730 = vmatprep.subr.mxu0 0.0
        %731 = vmatpush2.msra.mxu0 0.0
        %732 = vmatprep.subr.mxu0 0.0
        %733 = vmatpush2.msra.mxu0 0.0
        %734 = vmatprep.subr.mxu0 0.0
        %735 = vmatpush2.msra.mxu0 0.0
        %736 = vmatprep.subr.mxu0 0.0
        %737 = vmatpush2.msra.mxu0 0.0
        %738 = vmatprep.subr.mxu0 0.0
        %739 = vmatpush2.msra.mxu0 0.0
        %740 = vmatprep.subr.mxu0 0.0
        %741 = vmatpush2.msra.mxu0 0.0
        %742 = vmatprep.subr.mxu0 0.0
        %743 = vmatpush2.msra.mxu0 0.0
        %744 = vmatprep.subr.mxu0 0.0
        %745 = vmatpush2.msra.mxu0 0.0
        %746 = vmatprep.subr.mxu0 0.0
        %747 = vmatpush2.msra.mxu0 0.0
        %748 = vmatprep.mubr.f32.mxu0 0.0
        %749 = vmatmul.mubr.f32.gmra.mxu0 %v540
        %v750 = vpop.f32.mrf.mxu0
        %v751 = vadd.f32 %v536, %v750
        %v752 = vpop.f32.mrf.mxu0
        %v753 = vadd.f32 %v536, %v752
        %754 = vdwg.mxu0
        %755 = vmatprep.subr.mxu0 0.0
        %756 = vmatpush1.msra.mxu0 0.0
        %757 = vmatprep.subr.mxu0 0.0
        %758 = vmatpush1.msra.mxu0 0.0
        %759 = vmatprep.subr.mxu0 0.0
        %760 = vmatpush1.msra.mxu0 0.0
        %761 = vmatprep.subr.mxu0 0.0
        %762 = vmatpush1.msra.mxu0 0.0
        %763 = vmatprep.subr.mxu0 0.0
        %764 = vmatpush1.msra.mxu0 0.0
        %765 = vmatprep.subr.mxu0 0.0
        %766 = vmatpush1.msra.mxu0 0.0
        %767 = vmatprep.subr.mxu0 0.0
        %768 = vmatpush1.msra.mxu0 0.0
        %769 = vmatprep.subr.mxu0 0.0
        %770 = vmatpush1.msra.mxu0 0.0
        %771 = vmatprep.subr.mxu0 0.0
        %772 = vmatpush1.msra.mxu0 0.0
        %773 = vmatprep.subr.mxu0 0.0
        %774 = vmatpush1.msra.mxu0 0.0
        %775 = vmatprep.subr.mxu0 0.0
        %776 = vmatpush1.msra.mxu0 0.0
        %777 = vmatprep.subr.mxu0 0.0
        %778 = vmatpush1.msra.mxu0 0.0
        %779 = vmatprep.subr.mxu0 0.0
        %780 = vmatpush1.msra.mxu0 0.0
        %781 = vmatprep.subr.mxu0 0.0
        %782 = vmatpush1.msra.mxu0 0.0
        %783 = vmatprep.subr.mxu0 0.0
        %784 = vmatpush1.msra.mxu0 0.0
        %785 = vmatprep.subr.mxu0 %v528
        %786 = vmatpush1.msra.mxu0 %v527
        %787 = vmatprep.subr.mxu0 0.0
        %788 = vmatpush2.msra.mxu0 0.0
        %789 = vmatprep.subr.mxu0 0.0
        %790 = vmatpush2.msra.mxu0 0.0
        %791 = vmatprep.subr.mxu0 0.0
        %792 = vmatpush2.msra.mxu0 0.0
        %793 = vmatprep.subr.mxu0 0.0
        %794 = vmatpush2.msra.mxu0 0.0
        %795 = vmatprep.subr.mxu0 0.0
        %796 = vmatpush2.msra.mxu0 0.0
        %797 = vmatprep.subr.mxu0 0.0
        %798 = vmatpush2.msra.mxu0 0.0
        %799 = vmatprep.subr.mxu0 0.0
        %800 = vmatpush2.msra.mxu0 0.0
        %801 = vmatprep.subr.mxu0 0.0
        %802 = vmatpush2.msra.mxu0 0.0
        %803 = vmatprep.subr.mxu0 0.0
        %804 = vmatpush2.msra.mxu0 0.0
        %805 = vmatprep.subr.mxu0 0.0
        %806 = vmatpush2.msra.mxu0 0.0
        %807 = vmatprep.subr.mxu0 0.0
        %808 = vmatpush2.msra.mxu0 0.0
        %809 = vmatprep.subr.mxu0 0.0
        %810 = vmatpush2.msra.mxu0 0.0
        %811 = vmatprep.subr.mxu0 0.0
        %812 = vmatpush2.msra.mxu0 0.0
        %813 = vmatprep.subr.mxu0 0.0
        %814 = vmatpush2.msra.mxu0 0.0
        %815 = vmatprep.subr.mxu0 0.0
        %816 = vmatpush2.msra.mxu0 0.0
        %817 = vmatprep.subr.mxu0 0.0
        %818 = vmatpush2.msra.mxu0 0.0
        %819 = vmatprep.mubr.f32.mxu0 0.0
        %820 = vmatmul.mubr.f32.gmra.mxu0 %v540
        %v821 = vpop.f32.mrf.mxu0
        %v822 = vadd.f32 %v536, %v821
        %v823 = vpop.f32.mrf.mxu0
        %v824 = vadd.f32 %v536, %v823
        %825 = vdwg.mxu0
        %v826 = vmul.f32 %v609, 0.01
        %v827 = vmul.f32 %v611, 0.01
        %v828 = vmul.f32 %v680, 0.01
        %v829 = vmul.f32 %v682, 0.01
        %v830 = vmul.f32 %v751, 0.01
        %v831 = vmul.f32 %v753, 0.01
        %v832 = vmul.f32 %v822, 0.01
        %v833 = vmul.f32 %v824, 0.01
        %v834 = vmax.f32 %v609, %v826
        %v835 = vmax.f32 %v611, %v827
        %v836 = vmax.f32 %v680, %v828
        %v837 = vmax.f32 %v682, %v829
        %v838 = vmax.f32 %v751, %v830
        %v839 = vmax.f32 %v753, %v831
        %v840 = vmax.f32 %v822, %v832
        %v841 = vmax.f32 %v824, %v833
        %s842 = scalar_lea.vmem %s1, 16
        %v843 = vld [vmem:[%s842] sm:$0xff]
        %s844 = scalar_lea.vmem %s2, 16
        %v845 = vld [vmem:[%s844] sm:$0xff]
        %847 = vset.pattern.permute.xlu0 0
        %848 = vperm.xlu0 %847, %v845
        %v849 = vpop.permute.xlu0 %848
        %v852 = vsel %vm538, %v843, 0
        %854 = vmatprep.subr.mxu0 0.0
        %855 = vmatpush1.msra.mxu0 0.0
        %856 = vmatprep.subr.mxu0 0.0
        %857 = vmatpush1.msra.mxu0 0.0
        %858 = vmatprep.subr.mxu0 0.0
        %859 = vmatpush1.msra.mxu0 0.0
        %860 = vmatprep.subr.mxu0 0.0
        %861 = vmatpush1.msra.mxu0 0.0
        %862 = vmatprep.subr.mxu0 0.0
        %863 = vmatpush1.msra.mxu0 0.0
        %864 = vmatprep.subr.mxu0 0.0
        %865 = vmatpush1.msra.mxu0 0.0
        %866 = vmatprep.subr.mxu0 0.0
        %867 = vmatpush1.msra.mxu0 0.0
        %868 = vmatprep.subr.mxu0 0.0
        %869 = vmatpush1.msra.mxu0 0.0
        %870 = vmatprep.subr.mxu0 0.0
        %871 = vmatpush1.msra.mxu0 0.0
        %872 = vmatprep.subr.mxu0 0.0
        %873 = vmatpush1.msra.mxu0 0.0
        %874 = vmatprep.subr.mxu0 0.0
        %875 = vmatpush1.msra.mxu0 0.0
        %876 = vmatprep.subr.mxu0 0.0
        %877 = vmatpush1.msra.mxu0 0.0
        %878 = vmatprep.subr.mxu0 0.0
        %879 = vmatpush1.msra.mxu0 0.0
        %880 = vmatprep.subr.mxu0 0.0
        %881 = vmatpush1.msra.mxu0 0.0
        %882 = vmatprep.subr.mxu0 0.0
        %883 = vmatpush1.msra.mxu0 0.0
        %884 = vmatprep.subr.mxu0 %v835
        %885 = vmatpush1.msra.mxu0 %v834
        %886 = vmatprep.subr.mxu0 0.0
        %887 = vmatpush2.msra.mxu0 0.0
        %888 = vmatprep.subr.mxu0 0.0
        %889 = vmatpush2.msra.mxu0 0.0
        %890 = vmatprep.subr.mxu0 0.0
        %891 = vmatpush2.msra.mxu0 0.0
        %892 = vmatprep.subr.mxu0 0.0
        %893 = vmatpush2.msra.mxu0 0.0
        %894 = vmatprep.subr.mxu0 0.0
        %895 = vmatpush2.msra.mxu0 0.0
        %896 = vmatprep.subr.mxu0 0.0
        %897 = vmatpush2.msra.mxu0 0.0
        %898 = vmatprep.subr.mxu0 0.0
        %899 = vmatpush2.msra.mxu0 0.0
        %900 = vmatprep.subr.mxu0 0.0
        %901 = vmatpush2.msra.mxu0 0.0
        %902 = vmatprep.subr.mxu0 0.0
        %903 = vmatpush2.msra.mxu0 0.0
        %904 = vmatprep.subr.mxu0 0.0
        %905 = vmatpush2.msra.mxu0 0.0
        %906 = vmatprep.subr.mxu0 0.0
        %907 = vmatpush2.msra.mxu0 0.0
        %908 = vmatprep.subr.mxu0 0.0
        %909 = vmatpush2.msra.mxu0 0.0
        %910 = vmatprep.subr.mxu0 0.0
        %911 = vmatpush2.msra.mxu0 0.0
        %912 = vmatprep.subr.mxu0 0.0
        %913 = vmatpush2.msra.mxu0 0.0
        %914 = vmatprep.subr.mxu0 0.0
        %915 = vmatpush2.msra.mxu0 0.0
        %916 = vmatprep.subr.mxu0 0.0
        %917 = vmatpush2.msra.mxu0 0.0
        %918 = vmatprep.mubr.f32.mxu0 0.0
        %919 = vmatmul.mubr.f32.gmra.mxu0 %v852
        %v920 = vpop.f32.mrf.mxu0
        %v921 = vadd.f32 %v849, %v920
        %v922 = vpop.f32.mrf.mxu0
        %v923 = vadd.f32 %v849, %v922
        %924 = vdwg.mxu0
        %925 = vmatprep.subr.mxu0 0.0
        %926 = vmatpush1.msra.mxu0 0.0
        %927 = vmatprep.subr.mxu0 0.0
        %928 = vmatpush1.msra.mxu0 0.0
        %929 = vmatprep.subr.mxu0 0.0
        %930 = vmatpush1.msra.mxu0 0.0
        %931 = vmatprep.subr.mxu0 0.0
        %932 = vmatpush1.msra.mxu0 0.0
        %933 = vmatprep.subr.mxu0 0.0
        %934 = vmatpush1.msra.mxu0 0.0
        %935 = vmatprep.subr.mxu0 0.0
        %936 = vmatpush1.msra.mxu0 0.0
        %937 = vmatprep.subr.mxu0 0.0
        %938 = vmatpush1.msra.mxu0 0.0
        %939 = vmatprep.subr.mxu0 0.0
        %940 = vmatpush1.msra.mxu0 0.0
        %941 = vmatprep.subr.mxu0 0.0
        %942 = vmatpush1.msra.mxu0 0.0
        %943 = vmatprep.subr.mxu0 0.0
        %944 = vmatpush1.msra.mxu0 0.0
        %945 = vmatprep.subr.mxu0 0.0
        %946 = vmatpush1.msra.mxu0 0.0
        %947 = vmatprep.subr.mxu0 0.0
        %948 = vmatpush1.msra.mxu0 0.0
        %949 = vmatprep.subr.mxu0 0.0
        %950 = vmatpush1.msra.mxu0 0.0
        %951 = vmatprep.subr.mxu0 0.0
        %952 = vmatpush1.msra.mxu0 0.0
        %953 = vmatprep.subr.mxu0 0.0
        %954 = vmatpush1.msra.mxu0 0.0
        %955 = vmatprep.subr.mxu0 %v837
        %956 = vmatpush1.msra.mxu0 %v836
        %957 = vmatprep.subr.mxu0 0.0
        %958 = vmatpush2.msra.mxu0 0.0
        %959 = vmatprep.subr.mxu0 0.0
        %960 = vmatpush2.msra.mxu0 0.0
        %961 = vmatprep.subr.mxu0 0.0
        %962 = vmatpush2.msra.mxu0 0.0
        %963 = vmatprep.subr.mxu0 0.0
        %964 = vmatpush2.msra.mxu0 0.0
        %965 = vmatprep.subr.mxu0 0.0
        %966 = vmatpush2.msra.mxu0 0.0
        %967 = vmatprep.subr.mxu0 0.0
        %968 = vmatpush2.msra.mxu0 0.0
        %969 = vmatprep.subr.mxu0 0.0
        %970 = vmatpush2.msra.mxu0 0.0
        %971 = vmatprep.subr.mxu0 0.0
        %972 = vmatpush2.msra.mxu0 0.0
        %973 = vmatprep.subr.mxu0 0.0
        %974 = vmatpush2.msra.mxu0 0.0
        %975 = vmatprep.subr.mxu0 0.0
        %976 = vmatpush2.msra.mxu0 0.0
        %977 = vmatprep.subr.mxu0 0.0
        %978 = vmatpush2.msra.mxu0 0.0
        %979 = vmatprep.subr.mxu0 0.0
        %980 = vmatpush2.msra.mxu0 0.0
        %981 = vmatprep.subr.mxu0 0.0
        %982 = vmatpush2.msra.mxu0 0.0
        %983 = vmatprep.subr.mxu0 0.0
        %984 = vmatpush2.msra.mxu0 0.0
        %985 = vmatprep.subr.mxu0 0.0
        %986 = vmatpush2.msra.mxu0 0.0
        %987 = vmatprep.subr.mxu0 0.0
        %988 = vmatpush2.msra.mxu0 0.0
        %989 = vmatprep.mubr.f32.mxu0 0.0
        %990 = vmatmul.mubr.f32.gmra.mxu0 %v852
        %v991 = vpop.f32.mrf.mxu0
        %v992 = vadd.f32 %v849, %v991
        %v993 = vpop.f32.mrf.mxu0
        %v994 = vadd.f32 %v849, %v993
        %995 = vdwg.mxu0
        %996 = vmatprep.subr.mxu0 0.0
        %997 = vmatpush1.msra.mxu0 0.0
        %998 = vmatprep.subr.mxu0 0.0
        %999 = vmatpush1.msra.mxu0 0.0
        %1000 = vmatprep.subr.mxu0 0.0
        %1001 = vmatpush1.msra.mxu0 0.0
        %1002 = vmatprep.subr.mxu0 0.0
        %1003 = vmatpush1.msra.mxu0 0.0
        %1004 = vmatprep.subr.mxu0 0.0
        %1005 = vmatpush1.msra.mxu0 0.0
        %1006 = vmatprep.subr.mxu0 0.0
        %1007 = vmatpush1.msra.mxu0 0.0
        %1008 = vmatprep.subr.mxu0 0.0
        %1009 = vmatpush1.msra.mxu0 0.0
        %1010 = vmatprep.subr.mxu0 0.0
        %1011 = vmatpush1.msra.mxu0 0.0
        %1012 = vmatprep.subr.mxu0 0.0
        %1013 = vmatpush1.msra.mxu0 0.0
        %1014 = vmatprep.subr.mxu0 0.0
        %1015 = vmatpush1.msra.mxu0 0.0
        %1016 = vmatprep.subr.mxu0 0.0
        %1017 = vmatpush1.msra.mxu0 0.0
        %1018 = vmatprep.subr.mxu0 0.0
        %1019 = vmatpush1.msra.mxu0 0.0
        %1020 = vmatprep.subr.mxu0 0.0
        %1021 = vmatpush1.msra.mxu0 0.0
        %1022 = vmatprep.subr.mxu0 0.0
        %1023 = vmatpush1.msra.mxu0 0.0
        %1024 = vmatprep.subr.mxu0 0.0
        %1025 = vmatpush1.msra.mxu0 0.0
        %1026 = vmatprep.subr.mxu0 %v839
        %1027 = vmatpush1.msra.mxu0 %v838
        %1028 = vmatprep.subr.mxu0 0.0
        %1029 = vmatpush2.msra.mxu0 0.0
        %1030 = vmatprep.subr.mxu0 0.0
        %1031 = vmatpush2.msra.mxu0 0.0
        %1032 = vmatprep.subr.mxu0 0.0
        %1033 = vmatpush2.msra.mxu0 0.0
        %1034 = vmatprep.subr.mxu0 0.0
        %1035 = vmatpush2.msra.mxu0 0.0
        %1036 = vmatprep.subr.mxu0 0.0
        %1037 = vmatpush2.msra.mxu0 0.0
        %1038 = vmatprep.subr.mxu0 0.0
        %1039 = vmatpush2.msra.mxu0 0.0
        %1040 = vmatprep.subr.mxu0 0.0
        %1041 = vmatpush2.msra.mxu0 0.0
        %1042 = vmatprep.subr.mxu0 0.0
        %1043 = vmatpush2.msra.mxu0 0.0
        %1044 = vmatprep.subr.mxu0 0.0
        %1045 = vmatpush2.msra.mxu0 0.0
        %1046 = vmatprep.subr.mxu0 0.0
        %1047 = vmatpush2.msra.mxu0 0.0
        %1048 = vmatprep.subr.mxu0 0.0
        %1049 = vmatpush2.msra.mxu0 0.0
        %1050 = vmatprep.subr.mxu0 0.0
        %1051 = vmatpush2.msra.mxu0 0.0
        %1052 = vmatprep.subr.mxu0 0.0
        %1053 = vmatpush2.msra.mxu0 0.0
        %1054 = vmatprep.subr.mxu0 0.0
        %1055 = vmatpush2.msra.mxu0 0.0
        %1056 = vmatprep.subr.mxu0 0.0
        %1057 = vmatpush2.msra.mxu0 0.0
        %1058 = vmatprep.subr.mxu0 0.0
        %1059 = vmatpush2.msra.mxu0 0.0
        %1060 = vmatprep.mubr.f32.mxu0 0.0
        %1061 = vmatmul.mubr.f32.gmra.mxu0 %v852
        %v1062 = vpop.f32.mrf.mxu0
        %v1063 = vadd.f32 %v849, %v1062
        %v1064 = vpop.f32.mrf.mxu0
        %v1065 = vadd.f32 %v849, %v1064
        %1066 = vdwg.mxu0
        %1067 = vmatprep.subr.mxu0 0.0
        %1068 = vmatpush1.msra.mxu0 0.0
        %1069 = vmatprep.subr.mxu0 0.0
        %1070 = vmatpush1.msra.mxu0 0.0
        %1071 = vmatprep.subr.mxu0 0.0
        %1072 = vmatpush1.msra.mxu0 0.0
        %1073 = vmatprep.subr.mxu0 0.0
        %1074 = vmatpush1.msra.mxu0 0.0
        %1075 = vmatprep.subr.mxu0 0.0
        %1076 = vmatpush1.msra.mxu0 0.0
        %1077 = vmatprep.subr.mxu0 0.0
        %1078 = vmatpush1.msra.mxu0 0.0
        %1079 = vmatprep.subr.mxu0 0.0
        %1080 = vmatpush1.msra.mxu0 0.0
        %1081 = vmatprep.subr.mxu0 0.0
        %1082 = vmatpush1.msra.mxu0 0.0
        %1083 = vmatprep.subr.mxu0 0.0
        %1084 = vmatpush1.msra.mxu0 0.0
        %1085 = vmatprep.subr.mxu0 0.0
        %1086 = vmatpush1.msra.mxu0 0.0
        %1087 = vmatprep.subr.mxu0 0.0
        %1088 = vmatpush1.msra.mxu0 0.0
        %1089 = vmatprep.subr.mxu0 0.0
        %1090 = vmatpush1.msra.mxu0 0.0
        %1091 = vmatprep.subr.mxu0 0.0
        %1092 = vmatpush1.msra.mxu0 0.0
        %1093 = vmatprep.subr.mxu0 0.0
        %1094 = vmatpush1.msra.mxu0 0.0
        %1095 = vmatprep.subr.mxu0 0.0
        %1096 = vmatpush1.msra.mxu0 0.0
        %1097 = vmatprep.subr.mxu0 %v841
        %1098 = vmatpush1.msra.mxu0 %v840
        %1099 = vmatprep.subr.mxu0 0.0
        %1100 = vmatpush2.msra.mxu0 0.0
        %1101 = vmatprep.subr.mxu0 0.0
        %1102 = vmatpush2.msra.mxu0 0.0
        %1103 = vmatprep.subr.mxu0 0.0
        %1104 = vmatpush2.msra.mxu0 0.0
        %1105 = vmatprep.subr.mxu0 0.0
        %1106 = vmatpush2.msra.mxu0 0.0
        %1107 = vmatprep.subr.mxu0 0.0
        %1108 = vmatpush2.msra.mxu0 0.0
        %1109 = vmatprep.subr.mxu0 0.0
        %1110 = vmatpush2.msra.mxu0 0.0
        %1111 = vmatprep.subr.mxu0 0.0
        %1112 = vmatpush2.msra.mxu0 0.0
        %1113 = vmatprep.subr.mxu0 0.0
        %1114 = vmatpush2.msra.mxu0 0.0
        %1115 = vmatprep.subr.mxu0 0.0
        %1116 = vmatpush2.msra.mxu0 0.0
        %1117 = vmatprep.subr.mxu0 0.0
        %1118 = vmatpush2.msra.mxu0 0.0
        %1119 = vmatprep.subr.mxu0 0.0
        %1120 = vmatpush2.msra.mxu0 0.0
        %1121 = vmatprep.subr.mxu0 0.0
        %1122 = vmatpush2.msra.mxu0 0.0
        %1123 = vmatprep.subr.mxu0 0.0
        %1124 = vmatpush2.msra.mxu0 0.0
        %1125 = vmatprep.subr.mxu0 0.0
        %1126 = vmatpush2.msra.mxu0 0.0
        %1127 = vmatprep.subr.mxu0 0.0
        %1128 = vmatpush2.msra.mxu0 0.0
        %1129 = vmatprep.subr.mxu0 0.0
        %1130 = vmatpush2.msra.mxu0 0.0
        %1131 = vmatprep.mubr.f32.mxu0 0.0
        %1132 = vmatmul.mubr.f32.gmra.mxu0 %v852
        %v1133 = vpop.f32.mrf.mxu0
        %v1134 = vadd.f32 %v849, %v1133
        %v1135 = vpop.f32.mrf.mxu0
        %v1136 = vadd.f32 %v849, %v1135
        %1137 = vdwg.mxu0
        %v1138 = vmul.f32 %v921, 0.01
        %v1139 = vmul.f32 %v923, 0.01
        %v1140 = vmul.f32 %v992, 0.01
        %v1141 = vmul.f32 %v994, 0.01
        %v1142 = vmul.f32 %v1063, 0.01
        %v1143 = vmul.f32 %v1065, 0.01
        %v1144 = vmul.f32 %v1134, 0.01
        %v1145 = vmul.f32 %v1136, 0.01
        %v1146 = vmax.f32 %v921, %v1138
        %v1147 = vmax.f32 %v923, %v1139
        %v1148 = vmax.f32 %v992, %v1140
        %v1149 = vmax.f32 %v994, %v1141
        %v1150 = vmax.f32 %v1063, %v1142
        %v1151 = vmax.f32 %v1065, %v1143
        %v1152 = vmax.f32 %v1134, %v1144
        %v1153 = vmax.f32 %v1136, %v1145
        %s1154 = scalar_lea.vmem %s1, 24
        %v1155 = vld [vmem:[%s1154] sm:$0xff]
        %s1156 = scalar_lea.vmem %s2, 24
        %v1157 = vld [vmem:[%s1156] sm:$0xff]
        %1159 = vset.pattern.permute.xlu0 0
        %1160 = vperm.xlu0 %1159, %v1157
        %v1161 = vpop.permute.xlu0 %1160
        %v1164 = vsel %vm538, %v1155, 0
        %1166 = vmatprep.subr.mxu0 0.0
        %1167 = vmatpush1.msra.mxu0 0.0
        %1168 = vmatprep.subr.mxu0 0.0
        %1169 = vmatpush1.msra.mxu0 0.0
        %1170 = vmatprep.subr.mxu0 0.0
        %1171 = vmatpush1.msra.mxu0 0.0
        %1172 = vmatprep.subr.mxu0 0.0
        %1173 = vmatpush1.msra.mxu0 0.0
        %1174 = vmatprep.subr.mxu0 0.0
        %1175 = vmatpush1.msra.mxu0 0.0
        %1176 = vmatprep.subr.mxu0 0.0
        %1177 = vmatpush1.msra.mxu0 0.0
        %1178 = vmatprep.subr.mxu0 0.0
        %1179 = vmatpush1.msra.mxu0 0.0
        %1180 = vmatprep.subr.mxu0 0.0
        %1181 = vmatpush1.msra.mxu0 0.0
        %1182 = vmatprep.subr.mxu0 0.0
        %1183 = vmatpush1.msra.mxu0 0.0
        %1184 = vmatprep.subr.mxu0 0.0
        %1185 = vmatpush1.msra.mxu0 0.0
        %1186 = vmatprep.subr.mxu0 0.0
        %1187 = vmatpush1.msra.mxu0 0.0
        %1188 = vmatprep.subr.mxu0 0.0
        %1189 = vmatpush1.msra.mxu0 0.0
        %1190 = vmatprep.subr.mxu0 0.0
        %1191 = vmatpush1.msra.mxu0 0.0
        %1192 = vmatprep.subr.mxu0 0.0
        %1193 = vmatpush1.msra.mxu0 0.0
        %1194 = vmatprep.subr.mxu0 0.0
        %1195 = vmatpush1.msra.mxu0 0.0
        %1196 = vmatprep.subr.mxu0 %v1147
        %1197 = vmatpush1.msra.mxu0 %v1146
        %1198 = vmatprep.subr.mxu0 0.0
        %1199 = vmatpush2.msra.mxu0 0.0
        %1200 = vmatprep.subr.mxu0 0.0
        %1201 = vmatpush2.msra.mxu0 0.0
        %1202 = vmatprep.subr.mxu0 0.0
        %1203 = vmatpush2.msra.mxu0 0.0
        %1204 = vmatprep.subr.mxu0 0.0
        %1205 = vmatpush2.msra.mxu0 0.0
        %1206 = vmatprep.subr.mxu0 0.0
        %1207 = vmatpush2.msra.mxu0 0.0
        %1208 = vmatprep.subr.mxu0 0.0
        %1209 = vmatpush2.msra.mxu0 0.0
        %1210 = vmatprep.subr.mxu0 0.0
        %1211 = vmatpush2.msra.mxu0 0.0
        %1212 = vmatprep.subr.mxu0 0.0
        %1213 = vmatpush2.msra.mxu0 0.0
        %1214 = vmatprep.subr.mxu0 0.0
        %1215 = vmatpush2.msra.mxu0 0.0
        %1216 = vmatprep.subr.mxu0 0.0
        %1217 = vmatpush2.msra.mxu0 0.0
        %1218 = vmatprep.subr.mxu0 0.0
        %1219 = vmatpush2.msra.mxu0 0.0
        %1220 = vmatprep.subr.mxu0 0.0
        %1221 = vmatpush2.msra.mxu0 0.0
        %1222 = vmatprep.subr.mxu0 0.0
        %1223 = vmatpush2.msra.mxu0 0.0
        %1224 = vmatprep.subr.mxu0 0.0
        %1225 = vmatpush2.msra.mxu0 0.0
        %1226 = vmatprep.subr.mxu0 0.0
        %1227 = vmatpush2.msra.mxu0 0.0
        %1228 = vmatprep.subr.mxu0 0.0
        %1229 = vmatpush2.msra.mxu0 0.0
        %1230 = vmatprep.mubr.f32.mxu0 0.0
        %1231 = vmatmul.mubr.f32.gmra.mxu0 %v1164
        %v1232 = vpop.f32.mrf.mxu0
        %v1233 = vadd.f32 %v1161, %v1232
        %v1234 = vpop.f32.mrf.mxu0
        %v1235 = vadd.f32 %v1161, %v1234
        %1236 = vdwg.mxu0
        %1237 = vmatprep.subr.mxu0 0.0
        %1238 = vmatpush1.msra.mxu0 0.0
        %1239 = vmatprep.subr.mxu0 0.0
        %1240 = vmatpush1.msra.mxu0 0.0
        %1241 = vmatprep.subr.mxu0 0.0
        %1242 = vmatpush1.msra.mxu0 0.0
        %1243 = vmatprep.subr.mxu0 0.0
        %1244 = vmatpush1.msra.mxu0 0.0
        %1245 = vmatprep.subr.mxu0 0.0
        %1246 = vmatpush1.msra.mxu0 0.0
        %1247 = vmatprep.subr.mxu0 0.0
        %1248 = vmatpush1.msra.mxu0 0.0
        %1249 = vmatprep.subr.mxu0 0.0
        %1250 = vmatpush1.msra.mxu0 0.0
        %1251 = vmatprep.subr.mxu0 0.0
        %1252 = vmatpush1.msra.mxu0 0.0
        %1253 = vmatprep.subr.mxu0 0.0
        %1254 = vmatpush1.msra.mxu0 0.0
        %1255 = vmatprep.subr.mxu0 0.0
        %1256 = vmatpush1.msra.mxu0 0.0
        %1257 = vmatprep.subr.mxu0 0.0
        %1258 = vmatpush1.msra.mxu0 0.0
        %1259 = vmatprep.subr.mxu0 0.0
        %1260 = vmatpush1.msra.mxu0 0.0
        %1261 = vmatprep.subr.mxu0 0.0
        %1262 = vmatpush1.msra.mxu0 0.0
        %1263 = vmatprep.subr.mxu0 0.0
        %1264 = vmatpush1.msra.mxu0 0.0
        %1265 = vmatprep.subr.mxu0 0.0
        %1266 = vmatpush1.msra.mxu0 0.0
        %1267 = vmatprep.subr.mxu0 %v1149
        %1268 = vmatpush1.msra.mxu0 %v1148
        %1269 = vmatprep.subr.mxu0 0.0
        %1270 = vmatpush2.msra.mxu0 0.0
        %1271 = vmatprep.subr.mxu0 0.0
        %1272 = vmatpush2.msra.mxu0 0.0
        %1273 = vmatprep.subr.mxu0 0.0
        %1274 = vmatpush2.msra.mxu0 0.0
        %1275 = vmatprep.subr.mxu0 0.0
        %1276 = vmatpush2.msra.mxu0 0.0
        %1277 = vmatprep.subr.mxu0 0.0
        %1278 = vmatpush2.msra.mxu0 0.0
        %1279 = vmatprep.subr.mxu0 0.0
        %1280 = vmatpush2.msra.mxu0 0.0
        %1281 = vmatprep.subr.mxu0 0.0
        %1282 = vmatpush2.msra.mxu0 0.0
        %1283 = vmatprep.subr.mxu0 0.0
        %1284 = vmatpush2.msra.mxu0 0.0
        %1285 = vmatprep.subr.mxu0 0.0
        %1286 = vmatpush2.msra.mxu0 0.0
        %1287 = vmatprep.subr.mxu0 0.0
        %1288 = vmatpush2.msra.mxu0 0.0
        %1289 = vmatprep.subr.mxu0 0.0
        %1290 = vmatpush2.msra.mxu0 0.0
        %1291 = vmatprep.subr.mxu0 0.0
        %1292 = vmatpush2.msra.mxu0 0.0
        %1293 = vmatprep.subr.mxu0 0.0
        %1294 = vmatpush2.msra.mxu0 0.0
        %1295 = vmatprep.subr.mxu0 0.0
        %1296 = vmatpush2.msra.mxu0 0.0
        %1297 = vmatprep.subr.mxu0 0.0
        %1298 = vmatpush2.msra.mxu0 0.0
        %1299 = vmatprep.subr.mxu0 0.0
        %1300 = vmatpush2.msra.mxu0 0.0
        %1301 = vmatprep.mubr.f32.mxu0 0.0
        %1302 = vmatmul.mubr.f32.gmra.mxu0 %v1164
        %v1303 = vpop.f32.mrf.mxu0
        %v1304 = vadd.f32 %v1161, %v1303
        %v1305 = vpop.f32.mrf.mxu0
        %v1306 = vadd.f32 %v1161, %v1305
        %1307 = vdwg.mxu0
        %1308 = vmatprep.subr.mxu0 0.0
        %1309 = vmatpush1.msra.mxu0 0.0
        %1310 = vmatprep.subr.mxu0 0.0
        %1311 = vmatpush1.msra.mxu0 0.0
        %1312 = vmatprep.subr.mxu0 0.0
        %1313 = vmatpush1.msra.mxu0 0.0
        %1314 = vmatprep.subr.mxu0 0.0
        %1315 = vmatpush1.msra.mxu0 0.0
        %1316 = vmatprep.subr.mxu0 0.0
        %1317 = vmatpush1.msra.mxu0 0.0
        %1318 = vmatprep.subr.mxu0 0.0
        %1319 = vmatpush1.msra.mxu0 0.0
        %1320 = vmatprep.subr.mxu0 0.0
        %1321 = vmatpush1.msra.mxu0 0.0
        %1322 = vmatprep.subr.mxu0 0.0
        %1323 = vmatpush1.msra.mxu0 0.0
        %1324 = vmatprep.subr.mxu0 0.0
        %1325 = vmatpush1.msra.mxu0 0.0
        %1326 = vmatprep.subr.mxu0 0.0
        %1327 = vmatpush1.msra.mxu0 0.0
        %1328 = vmatprep.subr.mxu0 0.0
        %1329 = vmatpush1.msra.mxu0 0.0
        %1330 = vmatprep.subr.mxu0 0.0
        %1331 = vmatpush1.msra.mxu0 0.0
        %1332 = vmatprep.subr.mxu0 0.0
        %1333 = vmatpush1.msra.mxu0 0.0
        %1334 = vmatprep.subr.mxu0 0.0
        %1335 = vmatpush1.msra.mxu0 0.0
        %1336 = vmatprep.subr.mxu0 0.0
        %1337 = vmatpush1.msra.mxu0 0.0
        %1338 = vmatprep.subr.mxu0 %v1151
        %1339 = vmatpush1.msra.mxu0 %v1150
        %1340 = vmatprep.subr.mxu0 0.0
        %1341 = vmatpush2.msra.mxu0 0.0
        %1342 = vmatprep.subr.mxu0 0.0
        %1343 = vmatpush2.msra.mxu0 0.0
        %1344 = vmatprep.subr.mxu0 0.0
        %1345 = vmatpush2.msra.mxu0 0.0
        %1346 = vmatprep.subr.mxu0 0.0
        %1347 = vmatpush2.msra.mxu0 0.0
        %1348 = vmatprep.subr.mxu0 0.0
        %1349 = vmatpush2.msra.mxu0 0.0
        %1350 = vmatprep.subr.mxu0 0.0
        %1351 = vmatpush2.msra.mxu0 0.0
        %1352 = vmatprep.subr.mxu0 0.0
        %1353 = vmatpush2.msra.mxu0 0.0
        %1354 = vmatprep.subr.mxu0 0.0
        %1355 = vmatpush2.msra.mxu0 0.0
        %1356 = vmatprep.subr.mxu0 0.0
        %1357 = vmatpush2.msra.mxu0 0.0
        %1358 = vmatprep.subr.mxu0 0.0
        %1359 = vmatpush2.msra.mxu0 0.0
        %1360 = vmatprep.subr.mxu0 0.0
        %1361 = vmatpush2.msra.mxu0 0.0
        %1362 = vmatprep.subr.mxu0 0.0
        %1363 = vmatpush2.msra.mxu0 0.0
        %1364 = vmatprep.subr.mxu0 0.0
        %1365 = vmatpush2.msra.mxu0 0.0
        %1366 = vmatprep.subr.mxu0 0.0
        %1367 = vmatpush2.msra.mxu0 0.0
        %1368 = vmatprep.subr.mxu0 0.0
        %1369 = vmatpush2.msra.mxu0 0.0
        %1370 = vmatprep.subr.mxu0 0.0
        %1371 = vmatpush2.msra.mxu0 0.0
        %1372 = vmatprep.mubr.f32.mxu0 0.0
        %1373 = vmatmul.mubr.f32.gmra.mxu0 %v1164
        %v1374 = vpop.f32.mrf.mxu0
        %v1375 = vadd.f32 %v1161, %v1374
        %v1376 = vpop.f32.mrf.mxu0
        %v1377 = vadd.f32 %v1161, %v1376
        %1378 = vdwg.mxu0
        %1379 = vmatprep.subr.mxu0 0.0
        %1380 = vmatpush1.msra.mxu0 0.0
        %1381 = vmatprep.subr.mxu0 0.0
        %1382 = vmatpush1.msra.mxu0 0.0
        %1383 = vmatprep.subr.mxu0 0.0
        %1384 = vmatpush1.msra.mxu0 0.0
        %1385 = vmatprep.subr.mxu0 0.0
        %1386 = vmatpush1.msra.mxu0 0.0
        %1387 = vmatprep.subr.mxu0 0.0
        %1388 = vmatpush1.msra.mxu0 0.0
        %1389 = vmatprep.subr.mxu0 0.0
        %1390 = vmatpush1.msra.mxu0 0.0
        %1391 = vmatprep.subr.mxu0 0.0
        %1392 = vmatpush1.msra.mxu0 0.0
        %1393 = vmatprep.subr.mxu0 0.0
        %1394 = vmatpush1.msra.mxu0 0.0
        %1395 = vmatprep.subr.mxu0 0.0
        %1396 = vmatpush1.msra.mxu0 0.0
        %1397 = vmatprep.subr.mxu0 0.0
        %1398 = vmatpush1.msra.mxu0 0.0
        %1399 = vmatprep.subr.mxu0 0.0
        %1400 = vmatpush1.msra.mxu0 0.0
        %1401 = vmatprep.subr.mxu0 0.0
        %1402 = vmatpush1.msra.mxu0 0.0
        %1403 = vmatprep.subr.mxu0 0.0
        %1404 = vmatpush1.msra.mxu0 0.0
        %1405 = vmatprep.subr.mxu0 0.0
        %1406 = vmatpush1.msra.mxu0 0.0
        %1407 = vmatprep.subr.mxu0 0.0
        %1408 = vmatpush1.msra.mxu0 0.0
        %1409 = vmatprep.subr.mxu0 %v1153
        %1410 = vmatpush1.msra.mxu0 %v1152
        %1411 = vmatprep.subr.mxu0 0.0
        %1412 = vmatpush2.msra.mxu0 0.0
        %1413 = vmatprep.subr.mxu0 0.0
        %1414 = vmatpush2.msra.mxu0 0.0
        %1415 = vmatprep.subr.mxu0 0.0
        %1416 = vmatpush2.msra.mxu0 0.0
        %1417 = vmatprep.subr.mxu0 0.0
        %1418 = vmatpush2.msra.mxu0 0.0
        %1419 = vmatprep.subr.mxu0 0.0
        %1420 = vmatpush2.msra.mxu0 0.0
        %1421 = vmatprep.subr.mxu0 0.0
        %1422 = vmatpush2.msra.mxu0 0.0
        %1423 = vmatprep.subr.mxu0 0.0
        %1424 = vmatpush2.msra.mxu0 0.0
        %1425 = vmatprep.subr.mxu0 0.0
        %1426 = vmatpush2.msra.mxu0 0.0
        %1427 = vmatprep.subr.mxu0 0.0
        %1428 = vmatpush2.msra.mxu0 0.0
        %1429 = vmatprep.subr.mxu0 0.0
        %1430 = vmatpush2.msra.mxu0 0.0
        %1431 = vmatprep.subr.mxu0 0.0
        %1432 = vmatpush2.msra.mxu0 0.0
        %1433 = vmatprep.subr.mxu0 0.0
        %1434 = vmatpush2.msra.mxu0 0.0
        %1435 = vmatprep.subr.mxu0 0.0
        %1436 = vmatpush2.msra.mxu0 0.0
        %1437 = vmatprep.subr.mxu0 0.0
        %1438 = vmatpush2.msra.mxu0 0.0
        %1439 = vmatprep.subr.mxu0 0.0
        %1440 = vmatpush2.msra.mxu0 0.0
        %1441 = vmatprep.subr.mxu0 0.0
        %1442 = vmatpush2.msra.mxu0 0.0
        %1443 = vmatprep.mubr.f32.mxu0 0.0
        %1444 = vmatmul.mubr.f32.gmra.mxu0 %v1164
        %v1445 = vpop.f32.mrf.mxu0
        %v1446 = vadd.f32 %v1161, %v1445
        %v1447 = vpop.f32.mrf.mxu0
        %v1448 = vadd.f32 %v1161, %v1447
        %1449 = vdwg.mxu0
        %v1450 = vmul.f32 %v1233, 0.01
        %v1451 = vmul.f32 %v1235, 0.01
        %v1452 = vmul.f32 %v1304, 0.01
        %v1453 = vmul.f32 %v1306, 0.01
        %v1454 = vmul.f32 %v1375, 0.01
        %v1455 = vmul.f32 %v1377, 0.01
        %v1456 = vmul.f32 %v1446, 0.01
        %v1457 = vmul.f32 %v1448, 0.01
        %v1458 = vmax.f32 %v1233, %v1450
        %v1459 = vmax.f32 %v1235, %v1451
        %v1460 = vmax.f32 %v1304, %v1452
        %v1461 = vmax.f32 %v1306, %v1453
        %v1462 = vmax.f32 %v1375, %v1454
        %v1463 = vmax.f32 %v1377, %v1455
        %v1464 = vmax.f32 %v1446, %v1456
        %v1465 = vmax.f32 %v1448, %v1457
        %s1466 = scalar_lea.vmem %s1, 32
        %v1467 = vld [vmem:[%s1466] sm:$0xff]
        %s1468 = scalar_lea.vmem %s2, 32
        %v1469 = vld [vmem:[%s1468] sm:$0xff]
        %1471 = vset.pattern.permute.xlu0 0
        %1472 = vperm.xlu0 %1471, %v1469
        %v1473 = vpop.permute.xlu0 %1472
        %v1476 = vsel %vm538, %v1467, 0
        %1478 = vmatprep.subr.mxu0 0.0
        %1479 = vmatpush1.msra.mxu0 0.0
        %1480 = vmatprep.subr.mxu0 0.0
        %1481 = vmatpush1.msra.mxu0 0.0
        %1482 = vmatprep.subr.mxu0 0.0
        %1483 = vmatpush1.msra.mxu0 0.0
        %1484 = vmatprep.subr.mxu0 0.0
        %1485 = vmatpush1.msra.mxu0 0.0
        %1486 = vmatprep.subr.mxu0 0.0
        %1487 = vmatpush1.msra.mxu0 0.0
        %1488 = vmatprep.subr.mxu0 0.0
        %1489 = vmatpush1.msra.mxu0 0.0
        %1490 = vmatprep.subr.mxu0 0.0
        %1491 = vmatpush1.msra.mxu0 0.0
        %1492 = vmatprep.subr.mxu0 0.0
        %1493 = vmatpush1.msra.mxu0 0.0
        %1494 = vmatprep.subr.mxu0 0.0
        %1495 = vmatpush1.msra.mxu0 0.0
        %1496 = vmatprep.subr.mxu0 0.0
        %1497 = vmatpush1.msra.mxu0 0.0
        %1498 = vmatprep.subr.mxu0 0.0
        %1499 = vmatpush1.msra.mxu0 0.0
        %1500 = vmatprep.subr.mxu0 0.0
        %1501 = vmatpush1.msra.mxu0 0.0
        %1502 = vmatprep.subr.mxu0 0.0
        %1503 = vmatpush1.msra.mxu0 0.0
        %1504 = vmatprep.subr.mxu0 0.0
        %1505 = vmatpush1.msra.mxu0 0.0
        %1506 = vmatprep.subr.mxu0 0.0
        %1507 = vmatpush1.msra.mxu0 0.0
        %1508 = vmatprep.subr.mxu0 %v1459
        %1509 = vmatpush1.msra.mxu0 %v1458
        %1510 = vmatprep.subr.mxu0 0.0
        %1511 = vmatpush2.msra.mxu0 0.0
        %1512 = vmatprep.subr.mxu0 0.0
        %1513 = vmatpush2.msra.mxu0 0.0
        %1514 = vmatprep.subr.mxu0 0.0
        %1515 = vmatpush2.msra.mxu0 0.0
        %1516 = vmatprep.subr.mxu0 0.0
        %1517 = vmatpush2.msra.mxu0 0.0
        %1518 = vmatprep.subr.mxu0 0.0
        %1519 = vmatpush2.msra.mxu0 0.0
        %1520 = vmatprep.subr.mxu0 0.0
        %1521 = vmatpush2.msra.mxu0 0.0
        %1522 = vmatprep.subr.mxu0 0.0
        %1523 = vmatpush2.msra.mxu0 0.0
        %1524 = vmatprep.subr.mxu0 0.0
        %1525 = vmatpush2.msra.mxu0 0.0
        %1526 = vmatprep.subr.mxu0 0.0
        %1527 = vmatpush2.msra.mxu0 0.0
        %1528 = vmatprep.subr.mxu0 0.0
        %1529 = vmatpush2.msra.mxu0 0.0
        %1530 = vmatprep.subr.mxu0 0.0
        %1531 = vmatpush2.msra.mxu0 0.0
        %1532 = vmatprep.subr.mxu0 0.0
        %1533 = vmatpush2.msra.mxu0 0.0
        %1534 = vmatprep.subr.mxu0 0.0
        %1535 = vmatpush2.msra.mxu0 0.0
        %1536 = vmatprep.subr.mxu0 0.0
        %1537 = vmatpush2.msra.mxu0 0.0
        %1538 = vmatprep.subr.mxu0 0.0
        %1539 = vmatpush2.msra.mxu0 0.0
        %1540 = vmatprep.subr.mxu0 0.0
        %1541 = vmatpush2.msra.mxu0 0.0
        %1542 = vmatprep.mubr.f32.mxu0 0.0
        %1543 = vmatmul.mubr.f32.gmra.mxu0 %v1476
        %v1544 = vpop.f32.mrf.mxu0
        %v1545 = vadd.f32 %v1473, %v1544
        %v1546 = vpop.f32.mrf.mxu0
        %v1547 = vadd.f32 %v1473, %v1546
        %1548 = vdwg.mxu0
        %1549 = vmatprep.subr.mxu0 0.0
        %1550 = vmatpush1.msra.mxu0 0.0
        %1551 = vmatprep.subr.mxu0 0.0
        %1552 = vmatpush1.msra.mxu0 0.0
        %1553 = vmatprep.subr.mxu0 0.0
        %1554 = vmatpush1.msra.mxu0 0.0
        %1555 = vmatprep.subr.mxu0 0.0
        %1556 = vmatpush1.msra.mxu0 0.0
        %1557 = vmatprep.subr.mxu0 0.0
        %1558 = vmatpush1.msra.mxu0 0.0
        %1559 = vmatprep.subr.mxu0 0.0
        %1560 = vmatpush1.msra.mxu0 0.0
        %1561 = vmatprep.subr.mxu0 0.0
        %1562 = vmatpush1.msra.mxu0 0.0
        %1563 = vmatprep.subr.mxu0 0.0
        %1564 = vmatpush1.msra.mxu0 0.0
        %1565 = vmatprep.subr.mxu0 0.0
        %1566 = vmatpush1.msra.mxu0 0.0
        %1567 = vmatprep.subr.mxu0 0.0
        %1568 = vmatpush1.msra.mxu0 0.0
        %1569 = vmatprep.subr.mxu0 0.0
        %1570 = vmatpush1.msra.mxu0 0.0
        %1571 = vmatprep.subr.mxu0 0.0
        %1572 = vmatpush1.msra.mxu0 0.0
        %1573 = vmatprep.subr.mxu0 0.0
        %1574 = vmatpush1.msra.mxu0 0.0
        %1575 = vmatprep.subr.mxu0 0.0
        %1576 = vmatpush1.msra.mxu0 0.0
        %1577 = vmatprep.subr.mxu0 0.0
        %1578 = vmatpush1.msra.mxu0 0.0
        %1579 = vmatprep.subr.mxu0 %v1461
        %1580 = vmatpush1.msra.mxu0 %v1460
        %1581 = vmatprep.subr.mxu0 0.0
        %1582 = vmatpush2.msra.mxu0 0.0
        %1583 = vmatprep.subr.mxu0 0.0
        %1584 = vmatpush2.msra.mxu0 0.0
        %1585 = vmatprep.subr.mxu0 0.0
        %1586 = vmatpush2.msra.mxu0 0.0
        %1587 = vmatprep.subr.mxu0 0.0
        %1588 = vmatpush2.msra.mxu0 0.0
        %1589 = vmatprep.subr.mxu0 0.0
        %1590 = vmatpush2.msra.mxu0 0.0
        %1591 = vmatprep.subr.mxu0 0.0
        %1592 = vmatpush2.msra.mxu0 0.0
        %1593 = vmatprep.subr.mxu0 0.0
        %1594 = vmatpush2.msra.mxu0 0.0
        %1595 = vmatprep.subr.mxu0 0.0
        %1596 = vmatpush2.msra.mxu0 0.0
        %1597 = vmatprep.subr.mxu0 0.0
        %1598 = vmatpush2.msra.mxu0 0.0
        %1599 = vmatprep.subr.mxu0 0.0
        %1600 = vmatpush2.msra.mxu0 0.0
        %1601 = vmatprep.subr.mxu0 0.0
        %1602 = vmatpush2.msra.mxu0 0.0
        %1603 = vmatprep.subr.mxu0 0.0
        %1604 = vmatpush2.msra.mxu0 0.0
        %1605 = vmatprep.subr.mxu0 0.0
        %1606 = vmatpush2.msra.mxu0 0.0
        %1607 = vmatprep.subr.mxu0 0.0
        %1608 = vmatpush2.msra.mxu0 0.0
        %1609 = vmatprep.subr.mxu0 0.0
        %1610 = vmatpush2.msra.mxu0 0.0
        %1611 = vmatprep.subr.mxu0 0.0
        %1612 = vmatpush2.msra.mxu0 0.0
        %1613 = vmatprep.mubr.f32.mxu0 0.0
        %1614 = vmatmul.mubr.f32.gmra.mxu0 %v1476
        %v1615 = vpop.f32.mrf.mxu0
        %v1616 = vadd.f32 %v1473, %v1615
        %v1617 = vpop.f32.mrf.mxu0
        %v1618 = vadd.f32 %v1473, %v1617
        %1619 = vdwg.mxu0
        %1620 = vmatprep.subr.mxu0 0.0
        %1621 = vmatpush1.msra.mxu0 0.0
        %1622 = vmatprep.subr.mxu0 0.0
        %1623 = vmatpush1.msra.mxu0 0.0
        %1624 = vmatprep.subr.mxu0 0.0
        %1625 = vmatpush1.msra.mxu0 0.0
        %1626 = vmatprep.subr.mxu0 0.0
        %1627 = vmatpush1.msra.mxu0 0.0
        %1628 = vmatprep.subr.mxu0 0.0
        %1629 = vmatpush1.msra.mxu0 0.0
        %1630 = vmatprep.subr.mxu0 0.0
        %1631 = vmatpush1.msra.mxu0 0.0
        %1632 = vmatprep.subr.mxu0 0.0
        %1633 = vmatpush1.msra.mxu0 0.0
        %1634 = vmatprep.subr.mxu0 0.0
        %1635 = vmatpush1.msra.mxu0 0.0
        %1636 = vmatprep.subr.mxu0 0.0
        %1637 = vmatpush1.msra.mxu0 0.0
        %1638 = vmatprep.subr.mxu0 0.0
        %1639 = vmatpush1.msra.mxu0 0.0
        %1640 = vmatprep.subr.mxu0 0.0
        %1641 = vmatpush1.msra.mxu0 0.0
        %1642 = vmatprep.subr.mxu0 0.0
        %1643 = vmatpush1.msra.mxu0 0.0
        %1644 = vmatprep.subr.mxu0 0.0
        %1645 = vmatpush1.msra.mxu0 0.0
        %1646 = vmatprep.subr.mxu0 0.0
        %1647 = vmatpush1.msra.mxu0 0.0
        %1648 = vmatprep.subr.mxu0 0.0
        %1649 = vmatpush1.msra.mxu0 0.0
        %1650 = vmatprep.subr.mxu0 %v1463
        %1651 = vmatpush1.msra.mxu0 %v1462
        %1652 = vmatprep.subr.mxu0 0.0
        %1653 = vmatpush2.msra.mxu0 0.0
        %1654 = vmatprep.subr.mxu0 0.0
        %1655 = vmatpush2.msra.mxu0 0.0
        %1656 = vmatprep.subr.mxu0 0.0
        %1657 = vmatpush2.msra.mxu0 0.0
        %1658 = vmatprep.subr.mxu0 0.0
        %1659 = vmatpush2.msra.mxu0 0.0
        %1660 = vmatprep.subr.mxu0 0.0
        %1661 = vmatpush2.msra.mxu0 0.0
        %1662 = vmatprep.subr.mxu0 0.0
        %1663 = vmatpush2.msra.mxu0 0.0
        %1664 = vmatprep.subr.mxu0 0.0
        %1665 = vmatpush2.msra.mxu0 0.0
        %1666 = vmatprep.subr.mxu0 0.0
        %1667 = vmatpush2.msra.mxu0 0.0
        %1668 = vmatprep.subr.mxu0 0.0
        %1669 = vmatpush2.msra.mxu0 0.0
        %1670 = vmatprep.subr.mxu0 0.0
        %1671 = vmatpush2.msra.mxu0 0.0
        %1672 = vmatprep.subr.mxu0 0.0
        %1673 = vmatpush2.msra.mxu0 0.0
        %1674 = vmatprep.subr.mxu0 0.0
        %1675 = vmatpush2.msra.mxu0 0.0
        %1676 = vmatprep.subr.mxu0 0.0
        %1677 = vmatpush2.msra.mxu0 0.0
        %1678 = vmatprep.subr.mxu0 0.0
        %1679 = vmatpush2.msra.mxu0 0.0
        %1680 = vmatprep.subr.mxu0 0.0
        %1681 = vmatpush2.msra.mxu0 0.0
        %1682 = vmatprep.subr.mxu0 0.0
        %1683 = vmatpush2.msra.mxu0 0.0
        %1684 = vmatprep.mubr.f32.mxu0 0.0
        %1685 = vmatmul.mubr.f32.gmra.mxu0 %v1476
        %v1686 = vpop.f32.mrf.mxu0
        %v1687 = vadd.f32 %v1473, %v1686
        %v1688 = vpop.f32.mrf.mxu0
        %v1689 = vadd.f32 %v1473, %v1688
        %1690 = vdwg.mxu0
        %1691 = vmatprep.subr.mxu0 0.0
        %1692 = vmatpush1.msra.mxu0 0.0
        %1693 = vmatprep.subr.mxu0 0.0
        %1694 = vmatpush1.msra.mxu0 0.0
        %1695 = vmatprep.subr.mxu0 0.0
        %1696 = vmatpush1.msra.mxu0 0.0
        %1697 = vmatprep.subr.mxu0 0.0
        %1698 = vmatpush1.msra.mxu0 0.0
        %1699 = vmatprep.subr.mxu0 0.0
        %1700 = vmatpush1.msra.mxu0 0.0
        %1701 = vmatprep.subr.mxu0 0.0
        %1702 = vmatpush1.msra.mxu0 0.0
        %1703 = vmatprep.subr.mxu0 0.0
        %1704 = vmatpush1.msra.mxu0 0.0
        %1705 = vmatprep.subr.mxu0 0.0
        %1706 = vmatpush1.msra.mxu0 0.0
        %1707 = vmatprep.subr.mxu0 0.0
        %1708 = vmatpush1.msra.mxu0 0.0
        %1709 = vmatprep.subr.mxu0 0.0
        %1710 = vmatpush1.msra.mxu0 0.0
        %1711 = vmatprep.subr.mxu0 0.0
        %1712 = vmatpush1.msra.mxu0 0.0
        %1713 = vmatprep.subr.mxu0 0.0
        %1714 = vmatpush1.msra.mxu0 0.0
        %1715 = vmatprep.subr.mxu0 0.0
        %1716 = vmatpush1.msra.mxu0 0.0
        %1717 = vmatprep.subr.mxu0 0.0
        %1718 = vmatpush1.msra.mxu0 0.0
        %1719 = vmatprep.subr.mxu0 0.0
        %1720 = vmatpush1.msra.mxu0 0.0
        %1721 = vmatprep.subr.mxu0 %v1465
        %1722 = vmatpush1.msra.mxu0 %v1464
        %1723 = vmatprep.subr.mxu0 0.0
        %1724 = vmatpush2.msra.mxu0 0.0
        %1725 = vmatprep.subr.mxu0 0.0
        %1726 = vmatpush2.msra.mxu0 0.0
        %1727 = vmatprep.subr.mxu0 0.0
        %1728 = vmatpush2.msra.mxu0 0.0
        %1729 = vmatprep.subr.mxu0 0.0
        %1730 = vmatpush2.msra.mxu0 0.0
        %1731 = vmatprep.subr.mxu0 0.0
        %1732 = vmatpush2.msra.mxu0 0.0
        %1733 = vmatprep.subr.mxu0 0.0
        %1734 = vmatpush2.msra.mxu0 0.0
        %1735 = vmatprep.subr.mxu0 0.0
        %1736 = vmatpush2.msra.mxu0 0.0
        %1737 = vmatprep.subr.mxu0 0.0
        %1738 = vmatpush2.msra.mxu0 0.0
        %1739 = vmatprep.subr.mxu0 0.0
        %1740 = vmatpush2.msra.mxu0 0.0
        %1741 = vmatprep.subr.mxu0 0.0
        %1742 = vmatpush2.msra.mxu0 0.0
        %1743 = vmatprep.subr.mxu0 0.0
        %1744 = vmatpush2.msra.mxu0 0.0
        %1745 = vmatprep.subr.mxu0 0.0
        %1746 = vmatpush2.msra.mxu0 0.0
        %1747 = vmatprep.subr.mxu0 0.0
        %1748 = vmatpush2.msra.mxu0 0.0
        %1749 = vmatprep.subr.mxu0 0.0
        %1750 = vmatpush2.msra.mxu0 0.0
        %1751 = vmatprep.subr.mxu0 0.0
        %1752 = vmatpush2.msra.mxu0 0.0
        %1753 = vmatprep.subr.mxu0 0.0
        %1754 = vmatpush2.msra.mxu0 0.0
        %1755 = vmatprep.mubr.f32.mxu0 0.0
        %1756 = vmatmul.mubr.f32.gmra.mxu0 %v1476
        %v1757 = vpop.f32.mrf.mxu0
        %v1758 = vadd.f32 %v1473, %v1757
        %v1759 = vpop.f32.mrf.mxu0
        %v1760 = vadd.f32 %v1473, %v1759
        %1761 = vdwg.mxu0
        %v1770 = vcombine.low %v1545, %v1547
        %v1771 = vcombine.low %v1616, %v1618
        %v1772 = vcombine.low %v1687, %v1689
        %v1773 = vcombine.low %v1758, %v1760
        %1778 = vst [vmem:[%s186] sm:$0xff] %v1770
        %1779 = vst [vmem:[%s186 + $0x8] sm:$0xff] %v1771
        %1780 = vst [vmem:[%s186 + $0x10] sm:$0xff] %v1772
        %1781 = vst [vmem:[%s186 + $0x18] sm:$0xff] %v1773
        %s1782 = sand.u32 %s96, 1
        %s1783 = scalar_lea.sflag [#allocation4], %s1782
        %s1784 = sand.u32 %s96, 1
        %s1785 = smul.addr %s1784, 32
        %s1786 = scalar_lea.vmem [#allocation5], %s1785
        // Predicated region
        $region37: #{tpu_custom_call.1} parent=31 // pred_check
          %p1787 = pneg %p106
        $region38: #{tpu_custom_call.1} parent=31 // pred_check_branch
          %1789 = sbr.rel (%p1787) target = $region40
        $region39: #{tpu_custom_call.1} parent=31 // pred_region
          %s1790 = smul.u32 8, %s20
          %s1792 = ssub.s32 512, 512
          %1793 = vsyncadd %s1783, %s1792
          %s1794 = smul.addr %s1790, 64
          %s1795 = scalar_lea.hbm %s3, %s1794
          %s1797 = sshll.u32 %s1786, 4
          %s1798 = int_to_ptr.vmem [resolvable:$true] %s1797
          %1800 = dma.vmem_to_hbm [thread:$0]  %s1798, 512, %s1795, %s1783
        $region40: #{tpu_custom_call.1} parent=31 // pred_fallthru
          _
      $region32: #{tpu_custom_call.1} parent=5 // pred_fallthru
        _
      %p1801 = scmp.le.s32.totalorder 2, %s15
      // Predicated region
      $region41: #{tpu_custom_call.1} parent=5 // pred_check
        %p1802 = pneg %p1801
      $region42: #{tpu_custom_call.1} parent=5 // pred_check_branch
        %1804 = sbr.rel (%p1802) target = $region44
      $region43: #{tpu_custom_call.1} parent=5 // pred_region
        %s1805 = ssub.s32 %s15, 2
        // Predicated region
        $region45: #{tpu_custom_call.1} parent=43 // pred_check
          %p1806 = pneg %p112
        $region46: #{tpu_custom_call.1} parent=43 // pred_check_branch
          %1808 = sbr.rel (%p1806) target = $region48
        $region47: #{tpu_custom_call.1} parent=43 // pred_region
          %s1809 = sand.u32 %s97, 1
          %s1810 = scalar_lea.sflag [#allocation4], %s1809
          %s1811 = sand.u32 %s97, 1
          %s1812 = smul.addr %s1811, 32
          %s1813 = scalar_lea.vmem [#allocation5], %s1812
          %1814 = dma.done %s1810, 512
        $region48: #{tpu_custom_call.1} parent=43 // pred_fallthru
          _
      $region44: #{tpu_custom_call.1} parent=5 // pred_fallthru
        _
    $region6: #{tpu_custom_call.1} parent=1 // loop_footer
      %s19 = sadd.s32 1, %s15
    $region7: #{tpu_custom_call.1} parent=1 // loop_footer_branch
      %14 = sbr.rel target = $region3
    $region8: #{tpu_custom_call.1} parent=1 // loop_exit
      _
    %1815 = vsyncpa [#allocation3], 1
    %s1816 = scalar_lea.sflag [#allocation3], 1
    %1817 = vsyncpa %s1816, 1
    %1818 = vsyncpa [#allocation4], 1
    %s1819 = scalar_lea.sflag [#allocation4], 1
    %1820 = vsyncpa %s1819, 1

</llo_original>
